<compile_context>
chip_gen: v7x
topology: tpu7x:2x2x1
jax: 0.10.0
libtpu: 0.0.40
codegen_flags: <defaults>
</compile_context>

<pallas_src>
import functools

import jax
import jax.numpy as jnp
from jax.experimental import pallas as pl
from jax.experimental.pallas import tpu as pltpu


def _qst_encoder_kernel(num_layers, hidden_size, seq_len, batch, in_sizes,
                        emb_ref, *refs):
    """refs = [w_pack_0 .. w_pack_{L-1}, fc_w, b_all, fc_b, out_ref].

    emb_ref  : (S*B, E)        bf16  time-major flattened embeddings
    w_pack_l : (in_l + H, 4H)  bf16  rows [w_ih ; w_hh]
    fc_w     : (2*L*H, embed)  bf16
    b_all    : (L, 4H)         f32   rows (b_ih + b_hh) per layer
    fc_b     : (1, embed)      f32
    out_ref  : (B, embed)      f32
    """
    H = hidden_size
    L = num_layers
    S = seq_len
    B = batch
    E = in_sizes[0]
    w_refs = refs[:L]
    fcw_ref = refs[L]
    b_ref = refs[L + 1]
    fcb_ref = refs[L + 2]
    out_ref = refs[L + 3]

    # Hoisted weight/bias loads (avoid re-loading inside the unrolled loops).
    w_ih = []
    w_hh = []
    for l in range(L):
        in_l = in_sizes[l]
        w_ih.append(w_refs[l][0:in_l, :])            # (in_l, 4H) bf16
        w_hh.append(w_refs[l][in_l:in_l + H, :])     # (H, 4H)    bf16
    b_all = b_ref[...]                               # (L, 4H)    f32

    # Input-side tanh in f32 (v5e EUP has no bf16); bf16 only for MXU operands.
    x_f32 = jnp.tanh(emb_ref[...].astype(jnp.float32))          # (S*B, E)
    x_bf = x_f32.astype(jnp.bfloat16)

    # Layer-0 hoisted input matmul: one (S*B, E) x (E, 4H) MXU op for every
    # timestep; only h @ w_hh stays on the serial critical path.
    # TODO(synk): for realistic S/B/H stage `pre0` in a bf16 VMEM scratch and
    # switch the recurrence to lax.fori_loop to bound vreg live ranges.
    pre0 = jnp.dot(x_bf, w_ih[0],
                   preferred_element_type=jnp.float32) + b_all[0:1, :]  # (S*B,4H)

    # Hoisted lane masks for the single-EUP gate activation.  Gate order along
    # the 4H lanes is [i | f | g | o]: sigmoid on i,f,o and tanh on g.  With
    # sigmoid(x) = 0.5*(tanh(x/2)+1), one tanh pass over the full (B, 4H) vreg
    # plus a lane-masked scale/select covers all four gates.
    lane = jax.lax.broadcasted_iota(jnp.int32, (B, 4 * H), 1)
    is_g = (lane >= 2 * H) & (lane < 3 * H)                      # (B, 4H) bool
    gate_scale = jnp.where(is_g, 1.0, 0.5).astype(jnp.float32)   # (B, 4H) f32

    def lstm_cell(gates, c_prev):
        t_act = jnp.tanh(gates * gate_scale)                     # single EUP pass
        act = jnp.where(is_g, t_act, 0.5 * (t_act + 1.0))
        i_g = act[:, 0:H]
        f_g = act[:, H:2 * H]
        g_g = act[:, 2 * H:3 * H]
        o_g = act[:, 3 * H:4 * H]
        c_new = f_g * c_prev + i_g * g_g
        h_new = o_g * jnp.tanh(c_new)
        return h_new, c_new

    # Wavefront (diagonal) schedule over (layer, timestep).  Cell (l, t)
    # depends only on (l, t-1) and (l-1, t), both on wavefront l+t-1, so all
    # cells of a wavefront are independent.  Layers are visited in decreasing
    # l so layer l reads h[l-1] (the previous wavefront's value) before layer
    # l-1 overwrites it; layer l>0 consumes its input from registers.
    h = [jnp.zeros((B, H), jnp.float32) for _ in range(L)]
    c = [jnp.zeros((B, H), jnp.float32) for _ in range(L)]
    for w in range(S + L - 1):
        for l in range(min(L - 1, w), -1, -1):
            t = w - l
            if t < 0 or t >= S:
                continue
            if l == 0:
                gates = pre0[t * B:(t + 1) * B, :] + jnp.dot(
                    h[0].astype(jnp.bfloat16), w_hh[0],
                    preferred_element_type=jnp.float32)
            else:
                gates = (jnp.dot(h[l - 1].astype(jnp.bfloat16), w_ih[l],
                                 preferred_element_type=jnp.float32)
                         + jnp.dot(h[l].astype(jnp.bfloat16), w_hh[l],
                                   preferred_element_type=jnp.float32)
                         + b_all[l:l + 1, :])
            h[l], c[l] = lstm_cell(gates, c[l])

    # cat((hidden, cell), 2).transpose(0,1).reshape(B, -1) == [h0,c0,h1,c1,...]
    feat = jnp.concatenate(
        [jnp.concatenate([h[l], c[l]], axis=1) for l in range(L)], axis=1)
    feat = jnp.tanh(feat)                                         # (B, 2LH) f32

    out = jnp.dot(feat.astype(jnp.bfloat16), fcw_ref[...],
                  preferred_element_type=jnp.float32) + fcb_ref[...]
    out_ref[...] = out.astype(out_ref.dtype)


def qst_encoder_forward(question, params, *, num_layers, hidden_size, embed_size):
    """question: (B, S) int32 token indices -> (B, embed_size) f32."""
    H = hidden_size
    L = num_layers
    emb_table = params["embedding"]                       # (V, E) f32
    E = emb_table.shape[1]
    B, S = question.shape

    # Time-major transpose + batch padding on the int32 indices (not the
    # activations): the gather lands directly in kernel layout.  Pad the batch
    # to 16 so bf16 MXU LHS tiles are fully packed (v6e/v7x); padded rows are
    # sliced off at the end.
    B_pad = max(16, -(-B // 16) * 16)
    q_t = jnp.transpose(question)                         # (S, B)
    if B_pad != B:
        q_t = jnp.pad(q_t, ((0, 0), (0, B_pad - B)))      # padded rows -> index 0
    # Embedding gather stays in JAX glue; a realistic vocab table >> VMEM.
    emb = jnp.take(emb_table, q_t.reshape(-1), axis=0)    # (S*B_pad, E) f32
    emb = emb.astype(jnp.bfloat16)                        # halve the HBM->VMEM DMA

    in_sizes = tuple([E] + [H] * (L - 1))

    # bf16 weight packs (one DMA per layer); biases stay f32 (exact add).
    packs = [
        jnp.concatenate([params[f"w_ih_{l}"], params[f"w_hh_{l}"]],
                        axis=0).astype(jnp.bfloat16)      # (in_l + H, 4H)
        for l in range(L)
    ]
    fc_w = params["fc_w"].astype(jnp.bfloat16)            # (2LH, embed)
    b_all = jnp.concatenate(
        [params[f"b_{l}"] for l in range(L)], axis=0).astype(jnp.float32)  # (L,4H)
    fc_b = params["fc_b"].astype(jnp.float32)             # (1, embed)

    kernel_inputs = [emb] + packs + [fc_w, b_all, fc_b]

    # Advisory cost estimate so XLA schedules the tiny custom call sensibly.
    flops = (2 * S * B_pad * 4 * H * E
             + 2 * (2 * L - 1) * S * B_pad * 4 * H * H
             + 2 * B_pad * (2 * L * H) * embed_size)
    transcendentals = (S * B_pad * E + L * S * 5 * B_pad * H + B_pad * 2 * L * H)
    bytes_accessed = sum(int(x.size) * x.dtype.itemsize for x in kernel_inputs)
    bytes_accessed += B_pad * embed_size * 4

    kernel = functools.partial(
        _qst_encoder_kernel, num_layers, hidden_size, S, B_pad, in_sizes)
    vmem_spec = pl.BlockSpec(memory_space=pltpu.MemorySpace.VMEM)
    out = pl.pallas_call(
        kernel,
        out_shape=jax.ShapeDtypeStruct((B_pad, embed_size), jnp.float32),
        in_specs=[vmem_spec] * len(kernel_inputs),
        out_specs=vmem_spec,
        compiler_params=pltpu.CompilerParams(vmem_limit_bytes=32 * 1024 * 1024),
        cost_estimate=pl.CostEstimate(
            flops=flops,
            transcendentals=transcendentals,
            bytes_accessed=bytes_accessed,
        ),
    )(*kernel_inputs)
    return out[:B]


def init_params(key, *, qst_vocab_size, word_embed_size, embed_size, num_layers, hidden_size):
    n_keys = 3 + 4 * num_layers
    keys = list(jax.random.split(key, n_keys))
    k = iter(keys)
    params = {
        "embedding": 0.1 * jax.random.normal(next(k), (qst_vocab_size, word_embed_size), jnp.float32)
    }
    for l in range(num_layers):
        in_size = word_embed_size if l == 0 else hidden_size
        w_ih = 0.1 * jax.random.normal(next(k), (4 * hidden_size, in_size), jnp.float32)
        w_hh = 0.1 * jax.random.normal(next(k), (4 * hidden_size, hidden_size), jnp.float32)
        b_ih = 0.1 * jax.random.normal(next(k), (4 * hidden_size,), jnp.float32)
        b_hh = 0.1 * jax.random.normal(next(k), (4 * hidden_size,), jnp.float32)
        params[f"w_ih_{l}"] = jnp.transpose(w_ih)                 # (in, 4H)
        params[f"w_hh_{l}"] = jnp.transpose(w_hh)                 # (H, 4H)
        params[f"b_{l}"] = (b_ih + b_hh).reshape(1, 4 * hidden_size)
    fc_w = 0.1 * jax.random.normal(next(k), (embed_size, 2 * num_layers * hidden_size), jnp.float32)
    fc_b = 0.1 * jax.random.normal(next(k), (embed_size,), jnp.float32)
    params["fc_w"] = jnp.transpose(fc_w)                          # (2LH, embed)
    params["fc_b"] = fc_b.reshape(1, embed_size)
    return params


def qst_encoder_reference(question, params, *, num_layers, hidden_size, embed_size):
    """Pure-JAX f32 reference mirroring the PyTorch forward (correctness check)."""
    H = hidden_size
    x = jnp.tanh(jnp.take(params["embedding"], question, axis=0))  # (B, S, E)
    x = jnp.transpose(x, (1, 0, 2))                                 # (S, B, E)
    S, B, _ = x.shape
    layer_in = x
    h_fin, c_fin = [], []
    for l in range(num_layers):
        w_ih, w_hh, b = params[f"w_ih_{l}"], params[f"w_hh_{l}"], params[f"b_{l}"]
        h = jnp.zeros((B, H), jnp.float32)
        c = jnp.zeros((B, H), jnp.float32)
        outs = []
        for t in range(S):
            gates = layer_in[t] @ w_ih + h @ w_hh + b
            i_g = jax.nn.sigmoid(gates[:, 0:H])
            f_g = jax.nn.sigmoid(gates[:, H:2 * H])
            g_g = jnp.tanh(gates[:, 2 * H:3 * H])
            o_g = jax.nn.sigmoid(gates[:, 3 * H:4 * H])
            c = f_g * c + i_g * g_g
            h = o_g * jnp.tanh(c)
            outs.append(h)
        layer_in = jnp.stack(outs, axis=0)
        h_fin.append(h)
        c_fin.append(c)
    feat = jnp.concatenate(
        [jnp.concatenate([h_fin[l], c_fin[l]], axis=1) for l in range(num_layers)], axis=1
    )
    feat = jnp.tanh(feat)
    return feat @ params["fc_w"] + params["fc_b"]


if __name__ == "__main__":
    # Small config consistent with the module's __init__ signature.
    qst_vocab_size = 50
    word_embed_size = 32
    embed_size = 32
    num_layers = 2
    hidden_size = 32
    batch, seq = 2, 8

    root = jax.random.PRNGKey(0)
    k_param, k_q = jax.random.split(root)
    params = init_params(
        k_param,
        qst_vocab_size=qst_vocab_size,
        word_embed_size=word_embed_size,
        embed_size=embed_size,
        num_layers=num_layers,
        hidden_size=hidden_size,
    )
    question = jax.random.randint(k_q, (batch, seq), 0, qst_vocab_size, dtype=jnp.int32)

    out = qst_encoder_forward(
        question, params, num_layers=num_layers, hidden_size=hidden_size, embed_size=embed_size
    )
    out = jax.block_until_ready(out)

    ref = qst_encoder_reference(
        question, params, num_layers=num_layers, hidden_size=hidden_size, embed_size=embed_size
    )
    assert out.shape == (batch, embed_size)
    # bf16 MXU operands / bf16 embedding input with f32 accumulation: relaxed
    # tolerance vs the pure-f32 reference.
    assert jnp.allclose(out, ref, atol=3e-2, rtol=3e-2), float(jnp.max(jnp.abs(out - ref)))

    print("KERNEL_OK")
</pallas_src>

<mosaic_0001>
module attributes {stable_mosaic.version = 11 : i64} {
  func.func @_qst_encoder_kernel(%arg0: memref<128x32xbf16, #tpu.memory_space<vmem>>, %arg1: memref<64x128xbf16, #tpu.memory_space<vmem>>, %arg2: memref<64x128xbf16, #tpu.memory_space<vmem>>, %arg3: memref<128x32xbf16, #tpu.memory_space<vmem>>, %arg4: memref<2x128xf32, #tpu.memory_space<vmem>>, %arg5: memref<1x32xf32, #tpu.memory_space<vmem>>, %arg6: memref<16x32xf32, #tpu.memory_space<vmem>>) attributes {dimension_semantics = [], scalar_prefetch = 0 : i64, scratch_operands = 0 : i64, tpu.core_type = #tpu.core_type<tc>} {
    %c0 = arith.constant 0 : index
    %c0_0 = arith.constant 0 : index
    %0 = vector.load %arg1[%c0, %c0_0] : memref<64x128xbf16, #tpu.memory_space<vmem>>, vector<32x128xbf16>
    %c32 = arith.constant 32 : index
    %c0_1 = arith.constant 0 : index
    %1 = vector.load %arg1[%c32, %c0_1] : memref<64x128xbf16, #tpu.memory_space<vmem>>, vector<32x128xbf16>
    %c0_2 = arith.constant 0 : index
    %c0_3 = arith.constant 0 : index
    %2 = vector.load %arg2[%c0_2, %c0_3] : memref<64x128xbf16, #tpu.memory_space<vmem>>, vector<32x128xbf16>
    %c32_4 = arith.constant 32 : index
    %c0_5 = arith.constant 0 : index
    %3 = vector.load %arg2[%c32_4, %c0_5] : memref<64x128xbf16, #tpu.memory_space<vmem>>, vector<32x128xbf16>
    %c0_6 = arith.constant 0 : index
    %c0_7 = arith.constant 0 : index
    %4 = vector.load %arg4[%c0_6, %c0_7] : memref<2x128xf32, #tpu.memory_space<vmem>>, vector<2x128xf32>
    %c0_8 = arith.constant 0 : index
    %c0_9 = arith.constant 0 : index
    %5 = vector.load %arg0[%c0_8, %c0_9] : memref<128x32xbf16, #tpu.memory_space<vmem>>, vector<128x32xbf16>
    %6 = arith.extf %5 : vector<128x32xbf16> to vector<128x32xf32>
    %7 = math.tanh %6 : vector<128x32xf32>
    %8 = arith.truncf %7 : vector<128x32xf32> to vector<128x32xbf16>
    %cst = arith.constant dense<0.000000e+00> : vector<128x128xf32>
    %9 = tpu.matmul %8, %0, %cst {dimension_numbers = #tpu.dot_dimension_numbers<[1], [0], [0], [1], [0, 0, 1, 1], [], []>} : vector<128x32xbf16>, vector<32x128xbf16>, vector<128x128xf32> -> vector<128x128xf32>
    %10 = vector.extract_strided_slice %4 {offsets = [0, 0], sizes = [1, 128], strides = [1, 1]} : vector<2x128xf32> to vector<1x128xf32>
    %11 = vector.broadcast %10 : vector<1x128xf32> to vector<128x128xf32>
    %12 = arith.addf %9, %11 : vector<128x128xf32>
    %13 = tpu.iota {dimensions = array<i32: 1>} : vector<16x128xi32>
    %c64_i32 = arith.constant 64 : i32
    %14 = vector.broadcast %c64_i32 : i32 to vector<16x128xi32>
    %15 = arith.cmpi sge, %13, %14 : vector<16x128xi32>
    %c96_i32 = arith.constant 96 : i32
    %16 = vector.broadcast %c96_i32 : i32 to vector<16x128xi32>
    %17 = arith.cmpi slt, %13, %16 : vector<16x128xi32>
    %18 = arith.andi %15, %17 : vector<16x128xi1>
    %cst_10 = arith.constant 1.000000e+00 : f32
    %cst_11 = arith.constant 5.000000e-01 : f32
    %19 = vector.broadcast %cst_10 : f32 to vector<16x128xf32>
    %20 = vector.broadcast %cst_11 : f32 to vector<16x128xf32>
    %21 = arith.select %18, %19, %20 : vector<16x128xi1>, vector<16x128xf32>
    %cst_12 = arith.constant 0.000000e+00 : f32
    %22 = vector.broadcast %cst_12 : f32 to vector<16x32xf32>
    %cst_13 = arith.constant 0.000000e+00 : f32
    %23 = vector.broadcast %cst_13 : f32 to vector<16x32xf32>
    %cst_14 = arith.constant 0.000000e+00 : f32
    %24 = vector.broadcast %cst_14 : f32 to vector<16x32xf32>
    %cst_15 = arith.constant 0.000000e+00 : f32
    %25 = vector.broadcast %cst_15 : f32 to vector<16x32xf32>
    %26 = vector.extract_strided_slice %12 {offsets = [0, 0], sizes = [16, 128], strides = [1, 1]} : vector<128x128xf32> to vector<16x128xf32>
    %27 = arith.truncf %22 : vector<16x32xf32> to vector<16x32xbf16>
    %cst_16 = arith.constant dense<0.000000e+00> : vector<16x128xf32>
    %28 = tpu.matmul %27, %1, %cst_16 {dimension_numbers = #tpu.dot_dimension_numbers<[1], [0], [0], [1], [0, 0, 1, 1], [], []>} : vector<16x32xbf16>, vector<32x128xbf16>, vector<16x128xf32> -> vector<16x128xf32>
    %29 = arith.addf %26, %28 : vector<16x128xf32>
    %30 = arith.mulf %29, %21 : vector<16x128xf32>
    %31 = math.tanh %30 : vector<16x128xf32>
    %cst_17 = arith.constant 1.000000e+00 : f32
    %32 = vector.broadcast %cst_17 : f32 to vector<16x128xf32>
    %33 = arith.addf %31, %32 : vector<16x128xf32>
    %cst_18 = arith.constant 5.000000e-01 : f32
    %34 = vector.broadcast %cst_18 : f32 to vector<16x128xf32>
    %35 = arith.mulf %34, %33 : vector<16x128xf32>
    %36 = arith.select %18, %31, %35 : vector<16x128xi1>, vector<16x128xf32>
    %37 = vector.extract_strided_slice %36 {offsets = [0, 0], sizes = [16, 32], strides = [1, 1]} : vector<16x128xf32> to vector<16x32xf32>
    %38 = vector.extract_strided_slice %36 {offsets = [0, 32], sizes = [16, 32], strides = [1, 1]} : vector<16x128xf32> to vector<16x32xf32>
    %39 = vector.extract_strided_slice %36 {offsets = [0, 64], sizes = [16, 32], strides = [1, 1]} : vector<16x128xf32> to vector<16x32xf32>
    %40 = vector.extract_strided_slice %36 {offsets = [0, 96], sizes = [16, 32], strides = [1, 1]} : vector<16x128xf32> to vector<16x32xf32>
    %41 = arith.mulf %38, %24 : vector<16x32xf32>
    %42 = arith.mulf %37, %39 : vector<16x32xf32>
    %43 = arith.addf %41, %42 : vector<16x32xf32>
    %44 = math.tanh %43 : vector<16x32xf32>
    %45 = arith.mulf %40, %44 : vector<16x32xf32>
    %46 = arith.truncf %45 : vector<16x32xf32> to vector<16x32xbf16>
    %cst_19 = arith.constant dense<0.000000e+00> : vector<16x128xf32>
    %47 = tpu.matmul %46, %2, %cst_19 {dimension_numbers = #tpu.dot_dimension_numbers<[1], [0], [0], [1], [0, 0, 1, 1], [], []>} : vector<16x32xbf16>, vector<32x128xbf16>, vector<16x128xf32> -> vector<16x128xf32>
    %48 = arith.truncf %23 : vector<16x32xf32> to vector<16x32xbf16>
    %cst_20 = arith.constant dense<0.000000e+00> : vector<16x128xf32>
    %49 = tpu.matmul %48, %3, %cst_20 {dimension_numbers = #tpu.dot_dimension_numbers<[1], [0], [0], [1], [0, 0, 1, 1], [], []>} : vector<16x32xbf16>, vector<32x128xbf16>, vector<16x128xf32> -> vector<16x128xf32>
    %50 = arith.addf %47, %49 : vector<16x128xf32>
    %51 = vector.extract_strided_slice %4 {offsets = [1, 0], sizes = [1, 128], strides = [1, 1]} : vector<2x128xf32> to vector<1x128xf32>
    %52 = vector.broadcast %51 : vector<1x128xf32> to vector<16x128xf32>
    %53 = arith.addf %50, %52 : vector<16x128xf32>
    %54 = arith.mulf %53, %21 : vector<16x128xf32>
    %55 = math.tanh %54 : vector<16x128xf32>
    %cst_21 = arith.constant 1.000000e+00 : f32
    %56 = vector.broadcast %cst_21 : f32 to vector<16x128xf32>
    %57 = arith.addf %55, %56 : vector<16x128xf32>
    %cst_22 = arith.constant 5.000000e-01 : f32
    %58 = vector.broadcast %cst_22 : f32 to vector<16x128xf32>
    %59 = arith.mulf %58, %57 : vector<16x128xf32>
    %60 = arith.select %18, %55, %59 : vector<16x128xi1>, vector<16x128xf32>
    %61 = vector.extract_strided_slice %60 {offsets = [0, 0], sizes = [16, 32], strides = [1, 1]} : vector<16x128xf32> to vector<16x32xf32>
    %62 = vector.extract_strided_slice %60 {offsets = [0, 32], sizes = [16, 32], strides = [1, 1]} : vector<16x128xf32> to vector<16x32xf32>
    %63 = vector.extract_strided_slice %60 {offsets = [0, 64], sizes = [16, 32], strides = [1, 1]} : vector<16x128xf32> to vector<16x32xf32>
    %64 = vector.extract_strided_slice %60 {offsets = [0, 96], sizes = [16, 32], strides = [1, 1]} : vector<16x128xf32> to vector<16x32xf32>
    %65 = arith.mulf %62, %25 : vector<16x32xf32>
    %66 = arith.mulf %61, %63 : vector<16x32xf32>
    %67 = arith.addf %65, %66 : vector<16x32xf32>
    %68 = math.tanh %67 : vector<16x32xf32>
    %69 = arith.mulf %64, %68 : vector<16x32xf32>
    %70 = vector.extract_strided_slice %12 {offsets = [16, 0], sizes = [16, 128], strides = [1, 1]} : vector<128x128xf32> to vector<16x128xf32>
    %71 = arith.truncf %45 : vector<16x32xf32> to vector<16x32xbf16>
    %cst_23 = arith.constant dense<0.000000e+00> : vector<16x128xf32>
    %72 = tpu.matmul %71, %1, %cst_23 {dimension_numbers = #tpu.dot_dimension_numbers<[1], [0], [0], [1], [0, 0, 1, 1], [], []>} : vector<16x32xbf16>, vector<32x128xbf16>, vector<16x128xf32> -> vector<16x128xf32>
    %73 = arith.addf %70, %72 : vector<16x128xf32>
    %74 = arith.mulf %73, %21 : vector<16x128xf32>
    %75 = math.tanh %74 : vector<16x128xf32>
    %cst_24 = arith.constant 1.000000e+00 : f32
    %76 = vector.broadcast %cst_24 : f32 to vector<16x128xf32>
    %77 = arith.addf %75, %76 : vector<16x128xf32>
    %cst_25 = arith.constant 5.000000e-01 : f32
    %78 = vector.broadcast %cst_25 : f32 to vector<16x128xf32>
    %79 = arith.mulf %78, %77 : vector<16x128xf32>
    %80 = arith.select %18, %75, %79 : vector<16x128xi1>, vector<16x128xf32>
    %81 = vector.extract_strided_slice %80 {offsets = [0, 0], sizes = [16, 32], strides = [1, 1]} : vector<16x128xf32> to vector<16x32xf32>
    %82 = vector.extract_strided_slice %80 {offsets = [0, 32], sizes = [16, 32], strides = [1, 1]} : vector<16x128xf32> to vector<16x32xf32>
    %83 = vector.extract_strided_slice %80 {offsets = [0, 64], sizes = [16, 32], strides = [1, 1]} : vector<16x128xf32> to vector<16x32xf32>
    %84 = vector.extract_strided_slice %80 {offsets = [0, 96], sizes = [16, 32], strides = [1, 1]} : vector<16x128xf32> to vector<16x32xf32>
    %85 = arith.mulf %82, %43 : vector<16x32xf32>
    %86 = arith.mulf %81, %83 : vector<16x32xf32>
    %87 = arith.addf %85, %86 : vector<16x32xf32>
    %88 = math.tanh %87 : vector<16x32xf32>
    %89 = arith.mulf %84, %88 : vector<16x32xf32>
    %90 = arith.truncf %89 : vector<16x32xf32> to vector<16x32xbf16>
    %cst_26 = arith.constant dense<0.000000e+00> : vector<16x128xf32>
    %91 = tpu.matmul %90, %2, %cst_26 {dimension_numbers = #tpu.dot_dimension_numbers<[1], [0], [0], [1], [0, 0, 1, 1], [], []>} : vector<16x32xbf16>, vector<32x128xbf16>, vector<16x128xf32> -> vector<16x128xf32>
    %92 = arith.truncf %69 : vector<16x32xf32> to vector<16x32xbf16>
    %cst_27 = arith.constant dense<0.000000e+00> : vector<16x128xf32>
    %93 = tpu.matmul %92, %3, %cst_27 {dimension_numbers = #tpu.dot_dimension_numbers<[1], [0], [0], [1], [0, 0, 1, 1], [], []>} : vector<16x32xbf16>, vector<32x128xbf16>, vector<16x128xf32> -> vector<16x128xf32>
    %94 = arith.addf %91, %93 : vector<16x128xf32>
    %95 = vector.extract_strided_slice %4 {offsets = [1, 0], sizes = [1, 128], strides = [1, 1]} : vector<2x128xf32> to vector<1x128xf32>
    %96 = vector.broadcast %95 : vector<1x128xf32> to vector<16x128xf32>
    %97 = arith.addf %94, %96 : vector<16x128xf32>
    %98 = arith.mulf %97, %21 : vector<16x128xf32>
    %99 = math.tanh %98 : vector<16x128xf32>
    %cst_28 = arith.constant 1.000000e+00 : f32
    %100 = vector.broadcast %cst_28 : f32 to vector<16x128xf32>
    %101 = arith.addf %99, %100 : vector<16x128xf32>
    %cst_29 = arith.constant 5.000000e-01 : f32
    %102 = vector.broadcast %cst_29 : f32 to vector<16x128xf32>
    %103 = arith.mulf %102, %101 : vector<16x128xf32>
    %104 = arith.select %18, %99, %103 : vector<16x128xi1>, vector<16x128xf32>
    %105 = vector.extract_strided_slice %104 {offsets = [0, 0], sizes = [16, 32], strides = [1, 1]} : vector<16x128xf32> to vector<16x32xf32>
    %106 = vector.extract_strided_slice %104 {offsets = [0, 32], sizes = [16, 32], strides = [1, 1]} : vector<16x128xf32> to vector<16x32xf32>
    %107 = vector.extract_strided_slice %104 {offsets = [0, 64], sizes = [16, 32], strides = [1, 1]} : vector<16x128xf32> to vector<16x32xf32>
    %108 = vector.extract_strided_slice %104 {offsets = [0, 96], sizes = [16, 32], strides = [1, 1]} : vector<16x128xf32> to vector<16x32xf32>
    %109 = arith.mulf %106, %67 : vector<16x32xf32>
    %110 = arith.mulf %105, %107 : vector<16x32xf32>
    %111 = arith.addf %109, %110 : vector<16x32xf32>
    %112 = math.tanh %111 : vector<16x32xf32>
    %113 = arith.mulf %108, %112 : vector<16x32xf32>
    %114 = vector.extract_strided_slice %12 {offsets = [32, 0], sizes = [16, 128], strides = [1, 1]} : vector<128x128xf32> to vector<16x128xf32>
    %115 = arith.truncf %89 : vector<16x32xf32> to vector<16x32xbf16>
    %cst_30 = arith.constant dense<0.000000e+00> : vector<16x128xf32>
    %116 = tpu.matmul %115, %1, %cst_30 {dimension_numbers = #tpu.dot_dimension_numbers<[1], [0], [0], [1], [0, 0, 1, 1], [], []>} : vector<16x32xbf16>, vector<32x128xbf16>, vector<16x128xf32> -> vector<16x128xf32>
    %117 = arith.addf %114, %116 : vector<16x128xf32>
    %118 = arith.mulf %117, %21 : vector<16x128xf32>
    %119 = math.tanh %118 : vector<16x128xf32>
    %cst_31 = arith.constant 1.000000e+00 : f32
    %120 = vector.broadcast %cst_31 : f32 to vector<16x128xf32>
    %121 = arith.addf %119, %120 : vector<16x128xf32>
    %cst_32 = arith.constant 5.000000e-01 : f32
    %122 = vector.broadcast %cst_32 : f32 to vector<16x128xf32>
    %123 = arith.mulf %122, %121 : vector<16x128xf32>
    %124 = arith.select %18, %119, %123 : vector<16x128xi1>, vector<16x128xf32>
    %125 = vector.extract_strided_slice %124 {offsets = [0, 0], sizes = [16, 32], strides = [1, 1]} : vector<16x128xf32> to vector<16x32xf32>
    %126 = vector.extract_strided_slice %124 {offsets = [0, 32], sizes = [16, 32], strides = [1, 1]} : vector<16x128xf32> to vector<16x32xf32>
    %127 = vector.extract_strided_slice %124 {offsets = [0, 64], sizes = [16, 32], strides = [1, 1]} : vector<16x128xf32> to vector<16x32xf32>
    %128 = vector.extract_strided_slice %124 {offsets = [0, 96], sizes = [16, 32], strides = [1, 1]} : vector<16x128xf32> to vector<16x32xf32>
    %129 = arith.mulf %126, %87 : vector<16x32xf32>
    %130 = arith.mulf %125, %127 : vector<16x32xf32>
    %131 = arith.addf %129, %130 : vector<16x32xf32>
    %132 = math.tanh %131 : vector<16x32xf32>
    %133 = arith.mulf %128, %132 : vector<16x32xf32>
    %134 = arith.truncf %133 : vector<16x32xf32> to vector<16x32xbf16>
    %cst_33 = arith.constant dense<0.000000e+00> : vector<16x128xf32>
    %135 = tpu.matmul %134, %2, %cst_33 {dimension_numbers = #tpu.dot_dimension_numbers<[1], [0], [0], [1], [0, 0, 1, 1], [], []>} : vector<16x32xbf16>, vector<32x128xbf16>, vector<16x128xf32> -> vector<16x128xf32>
    %136 = arith.truncf %113 : vector<16x32xf32> to vector<16x32xbf16>
    %cst_34 = arith.constant dense<0.000000e+00> : vector<16x128xf32>
    %137 = tpu.matmul %136, %3, %cst_34 {dimension_numbers = #tpu.dot_dimension_numbers<[1], [0], [0], [1], [0, 0, 1, 1], [], []>} : vector<16x32xbf16>, vector<32x128xbf16>, vector<16x128xf32> -> vector<16x128xf32>
    %138 = arith.addf %135, %137 : vector<16x128xf32>
    %139 = vector.extract_strided_slice %4 {offsets = [1, 0], sizes = [1, 128], strides = [1, 1]} : vector<2x128xf32> to vector<1x128xf32>
    %140 = vector.broadcast %139 : vector<1x128xf32> to vector<16x128xf32>
    %141 = arith.addf %138, %140 : vector<16x128xf32>
    %142 = arith.mulf %141, %21 : vector<16x128xf32>
    %143 = math.tanh %142 : vector<16x128xf32>
    %cst_35 = arith.constant 1.000000e+00 : f32
    %144 = vector.broadcast %cst_35 : f32 to vector<16x128xf32>
    %145 = arith.addf %143, %144 : vector<16x128xf32>
    %cst_36 = arith.constant 5.000000e-01 : f32
    %146 = vector.broadcast %cst_36 : f32 to vector<16x128xf32>
    %147 = arith.mulf %146, %145 : vector<16x128xf32>
    %148 = arith.select %18, %143, %147 : vector<16x128xi1>, vector<16x128xf32>
    %149 = vector.extract_strided_slice %148 {offsets = [0, 0], sizes = [16, 32], strides = [1, 1]} : vector<16x128xf32> to vector<16x32xf32>
    %150 = vector.extract_strided_slice %148 {offsets = [0, 32], sizes = [16, 32], strides = [1, 1]} : vector<16x128xf32> to vector<16x32xf32>
    %151 = vector.extract_strided_slice %148 {offsets = [0, 64], sizes = [16, 32], strides = [1, 1]} : vector<16x128xf32> to vector<16x32xf32>
    %152 = vector.extract_strided_slice %148 {offsets = [0, 96], sizes = [16, 32], strides = [1, 1]} : vector<16x128xf32> to vector<16x32xf32>
    %153 = arith.mulf %150, %111 : vector<16x32xf32>
    %154 = arith.mulf %149, %151 : vector<16x32xf32>
    %155 = arith.addf %153, %154 : vector<16x32xf32>
    %156 = math.tanh %155 : vector<16x32xf32>
    %157 = arith.mulf %152, %156 : vector<16x32xf32>
    %158 = vector.extract_strided_slice %12 {offsets = [48, 0], sizes = [16, 128], strides = [1, 1]} : vector<128x128xf32> to vector<16x128xf32>
    %159 = arith.truncf %133 : vector<16x32xf32> to vector<16x32xbf16>
    %cst_37 = arith.constant dense<0.000000e+00> : vector<16x128xf32>
    %160 = tpu.matmul %159, %1, %cst_37 {dimension_numbers = #tpu.dot_dimension_numbers<[1], [0], [0], [1], [0, 0, 1, 1], [], []>} : vector<16x32xbf16>, vector<32x128xbf16>, vector<16x128xf32> -> vector<16x128xf32>
    %161 = arith.addf %158, %160 : vector<16x128xf32>
    %162 = arith.mulf %161, %21 : vector<16x128xf32>
    %163 = math.tanh %162 : vector<16x128xf32>
    %cst_38 = arith.constant 1.000000e+00 : f32
    %164 = vector.broadcast %cst_38 : f32 to vector<16x128xf32>
    %165 = arith.addf %163, %164 : vector<16x128xf32>
    %cst_39 = arith.constant 5.000000e-01 : f32
    %166 = vector.broadcast %cst_39 : f32 to vector<16x128xf32>
    %167 = arith.mulf %166, %165 : vector<16x128xf32>
    %168 = arith.select %18, %163, %167 : vector<16x128xi1>, vector<16x128xf32>
    %169 = vector.extract_strided_slice %168 {offsets = [0, 0], sizes = [16, 32], strides = [1, 1]} : vector<16x128xf32> to vector<16x32xf32>
    %170 = vector.extract_strided_slice %168 {offsets = [0, 32], sizes = [16, 32], strides = [1, 1]} : vector<16x128xf32> to vector<16x32xf32>
    %171 = vector.extract_strided_slice %168 {offsets = [0, 64], sizes = [16, 32], strides = [1, 1]} : vector<16x128xf32> to vector<16x32xf32>
    %172 = vector.extract_strided_slice %168 {offsets = [0, 96], sizes = [16, 32], strides = [1, 1]} : vector<16x128xf32> to vector<16x32xf32>
    %173 = arith.mulf %170, %131 : vector<16x32xf32>
    %174 = arith.mulf %169, %171 : vector<16x32xf32>
    %175 = arith.addf %173, %174 : vector<16x32xf32>
    %176 = math.tanh %175 : vector<16x32xf32>
    %177 = arith.mulf %172, %176 : vector<16x32xf32>
    %178 = arith.truncf %177 : vector<16x32xf32> to vector<16x32xbf16>
    %cst_40 = arith.constant dense<0.000000e+00> : vector<16x128xf32>
    %179 = tpu.matmul %178, %2, %cst_40 {dimension_numbers = #tpu.dot_dimension_numbers<[1], [0], [0], [1], [0, 0, 1, 1], [], []>} : vector<16x32xbf16>, vector<32x128xbf16>, vector<16x128xf32> -> vector<16x128xf32>
    %180 = arith.truncf %157 : vector<16x32xf32> to vector<16x32xbf16>
    %cst_41 = arith.constant dense<0.000000e+00> : vector<16x128xf32>
    %181 = tpu.matmul %180, %3, %cst_41 {dimension_numbers = #tpu.dot_dimension_numbers<[1], [0], [0], [1], [0, 0, 1, 1], [], []>} : vector<16x32xbf16>, vector<32x128xbf16>, vector<16x128xf32> -> vector<16x128xf32>
    %182 = arith.addf %179, %181 : vector<16x128xf32>
    %183 = vector.extract_strided_slice %4 {offsets = [1, 0], sizes = [1, 128], strides = [1, 1]} : vector<2x128xf32> to vector<1x128xf32>
    %184 = vector.broadcast %183 : vector<1x128xf32> to vector<16x128xf32>
    %185 = arith.addf %182, %184 : vector<16x128xf32>
    %186 = arith.mulf %185, %21 : vector<16x128xf32>
    %187 = math.tanh %186 : vector<16x128xf32>
    %cst_42 = arith.constant 1.000000e+00 : f32
    %188 = vector.broadcast %cst_42 : f32 to vector<16x128xf32>
    %189 = arith.addf %187, %188 : vector<16x128xf32>
    %cst_43 = arith.constant 5.000000e-01 : f32
    %190 = vector.broadcast %cst_43 : f32 to vector<16x128xf32>
    %191 = arith.mulf %190, %189 : vector<16x128xf32>
    %192 = arith.select %18, %187, %191 : vector<16x128xi1>, vector<16x128xf32>
    %193 = vector.extract_strided_slice %192 {offsets = [0, 0], sizes = [16, 32], strides = [1, 1]} : vector<16x128xf32> to vector<16x32xf32>
    %194 = vector.extract_strided_slice %192 {offsets = [0, 32], sizes = [16, 32], strides = [1, 1]} : vector<16x128xf32> to vector<16x32xf32>
    %195 = vector.extract_strided_slice %192 {offsets = [0, 64], sizes = [16, 32], strides = [1, 1]} : vector<16x128xf32> to vector<16x32xf32>
    %196 = vector.extract_strided_slice %192 {offsets = [0, 96], sizes = [16, 32], strides = [1, 1]} : vector<16x128xf32> to vector<16x32xf32>
    %197 = arith.mulf %194, %155 : vector<16x32xf32>
    %198 = arith.mulf %193, %195 : vector<16x32xf32>
    %199 = arith.addf %197, %198 : vector<16x32xf32>
    %200 = math.tanh %199 : vector<16x32xf32>
    %201 = arith.mulf %196, %200 : vector<16x32xf32>
    %202 = vector.extract_strided_slice %12 {offsets = [64, 0], sizes = [16, 128], strides = [1, 1]} : vector<128x128xf32> to vector<16x128xf32>
    %203 = arith.truncf %177 : vector<16x32xf32> to vector<16x32xbf16>
    %cst_44 = arith.constant dense<0.000000e+00> : vector<16x128xf32>
    %204 = tpu.matmul %203, %1, %cst_44 {dimension_numbers = #tpu.dot_dimension_numbers<[1], [0], [0], [1], [0, 0, 1, 1], [], []>} : vector<16x32xbf16>, vector<32x128xbf16>, vector<16x128xf32> -> vector<16x128xf32>
    %205 = arith.addf %202, %204 : vector<16x128xf32>
    %206 = arith.mulf %205, %21 : vector<16x128xf32>
    %207 = math.tanh %206 : vector<16x128xf32>
    %cst_45 = arith.constant 1.000000e+00 : f32
    %208 = vector.broadcast %cst_45 : f32 to vector<16x128xf32>
    %209 = arith.addf %207, %208 : vector<16x128xf32>
    %cst_46 = arith.constant 5.000000e-01 : f32
    %210 = vector.broadcast %cst_46 : f32 to vector<16x128xf32>
    %211 = arith.mulf %210, %209 : vector<16x128xf32>
    %212 = arith.select %18, %207, %211 : vector<16x128xi1>, vector<16x128xf32>
    %213 = vector.extract_strided_slice %212 {offsets = [0, 0], sizes = [16, 32], strides = [1, 1]} : vector<16x128xf32> to vector<16x32xf32>
    %214 = vector.extract_strided_slice %212 {offsets = [0, 32], sizes = [16, 32], strides = [1, 1]} : vector<16x128xf32> to vector<16x32xf32>
    %215 = vector.extract_strided_slice %212 {offsets = [0, 64], sizes = [16, 32], strides = [1, 1]} : vector<16x128xf32> to vector<16x32xf32>
    %216 = vector.extract_strided_slice %212 {offsets = [0, 96], sizes = [16, 32], strides = [1, 1]} : vector<16x128xf32> to vector<16x32xf32>
    %217 = arith.mulf %214, %175 : vector<16x32xf32>
    %218 = arith.mulf %213, %215 : vector<16x32xf32>
    %219 = arith.addf %217, %218 : vector<16x32xf32>
    %220 = math.tanh %219 : vector<16x32xf32>
    %221 = arith.mulf %216, %220 : vector<16x32xf32>
    %222 = arith.truncf %221 : vector<16x32xf32> to vector<16x32xbf16>
    %cst_47 = arith.constant dense<0.000000e+00> : vector<16x128xf32>
    %223 = tpu.matmul %222, %2, %cst_47 {dimension_numbers = #tpu.dot_dimension_numbers<[1], [0], [0], [1], [0, 0, 1, 1], [], []>} : vector<16x32xbf16>, vector<32x128xbf16>, vector<16x128xf32> -> vector<16x128xf32>
    %224 = arith.truncf %201 : vector<16x32xf32> to vector<16x32xbf16>
    %cst_48 = arith.constant dense<0.000000e+00> : vector<16x128xf32>
    %225 = tpu.matmul %224, %3, %cst_48 {dimension_numbers = #tpu.dot_dimension_numbers<[1], [0], [0], [1], [0, 0, 1, 1], [], []>} : vector<16x32xbf16>, vector<32x128xbf16>, vector<16x128xf32> -> vector<16x128xf32>
    %226 = arith.addf %223, %225 : vector<16x128xf32>
    %227 = vector.extract_strided_slice %4 {offsets = [1, 0], sizes = [1, 128], strides = [1, 1]} : vector<2x128xf32> to vector<1x128xf32>
    %228 = vector.broadcast %227 : vector<1x128xf32> to vector<16x128xf32>
    %229 = arith.addf %226, %228 : vector<16x128xf32>
    %230 = arith.mulf %229, %21 : vector<16x128xf32>
    %231 = math.tanh %230 : vector<16x128xf32>
    %cst_49 = arith.constant 1.000000e+00 : f32
    %232 = vector.broadcast %cst_49 : f32 to vector<16x128xf32>
    %233 = arith.addf %231, %232 : vector<16x128xf32>
    %cst_50 = arith.constant 5.000000e-01 : f32
    %234 = vector.broadcast %cst_50 : f32 to vector<16x128xf32>
    %235 = arith.mulf %234, %233 : vector<16x128xf32>
    %236 = arith.select %18, %231, %235 : vector<16x128xi1>, vector<16x128xf32>
    %237 = vector.extract_strided_slice %236 {offsets = [0, 0], sizes = [16, 32], strides = [1, 1]} : vector<16x128xf32> to vector<16x32xf32>
    %238 = vector.extract_strided_slice %236 {offsets = [0, 32], sizes = [16, 32], strides = [1, 1]} : vector<16x128xf32> to vector<16x32xf32>
    %239 = vector.extract_strided_slice %236 {offsets = [0, 64], sizes = [16, 32], strides = [1, 1]} : vector<16x128xf32> to vector<16x32xf32>
    %240 = vector.extract_strided_slice %236 {offsets = [0, 96], sizes = [16, 32], strides = [1, 1]} : vector<16x128xf32> to vector<16x32xf32>
    %241 = arith.mulf %238, %199 : vector<16x32xf32>
    %242 = arith.mulf %237, %239 : vector<16x32xf32>
    %243 = arith.addf %241, %242 : vector<16x32xf32>
    %244 = math.tanh %243 : vector<16x32xf32>
    %245 = arith.mulf %240, %244 : vector<16x32xf32>
    %246 = vector.extract_strided_slice %12 {offsets = [80, 0], sizes = [16, 128], strides = [1, 1]} : vector<128x128xf32> to vector<16x128xf32>
    %247 = arith.truncf %221 : vector<16x32xf32> to vector<16x32xbf16>
    %cst_51 = arith.constant dense<0.000000e+00> : vector<16x128xf32>
    %248 = tpu.matmul %247, %1, %cst_51 {dimension_numbers = #tpu.dot_dimension_numbers<[1], [0], [0], [1], [0, 0, 1, 1], [], []>} : vector<16x32xbf16>, vector<32x128xbf16>, vector<16x128xf32> -> vector<16x128xf32>
    %249 = arith.addf %246, %248 : vector<16x128xf32>
    %250 = arith.mulf %249, %21 : vector<16x128xf32>
    %251 = math.tanh %250 : vector<16x128xf32>
    %cst_52 = arith.constant 1.000000e+00 : f32
    %252 = vector.broadcast %cst_52 : f32 to vector<16x128xf32>
    %253 = arith.addf %251, %252 : vector<16x128xf32>
    %cst_53 = arith.constant 5.000000e-01 : f32
    %254 = vector.broadcast %cst_53 : f32 to vector<16x128xf32>
    %255 = arith.mulf %254, %253 : vector<16x128xf32>
    %256 = arith.select %18, %251, %255 : vector<16x128xi1>, vector<16x128xf32>
    %257 = vector.extract_strided_slice %256 {offsets = [0, 0], sizes = [16, 32], strides = [1, 1]} : vector<16x128xf32> to vector<16x32xf32>
    %258 = vector.extract_strided_slice %256 {offsets = [0, 32], sizes = [16, 32], strides = [1, 1]} : vector<16x128xf32> to vector<16x32xf32>
    %259 = vector.extract_strided_slice %256 {offsets = [0, 64], sizes = [16, 32], strides = [1, 1]} : vector<16x128xf32> to vector<16x32xf32>
    %260 = vector.extract_strided_slice %256 {offsets = [0, 96], sizes = [16, 32], strides = [1, 1]} : vector<16x128xf32> to vector<16x32xf32>
    %261 = arith.mulf %258, %219 : vector<16x32xf32>
    %262 = arith.mulf %257, %259 : vector<16x32xf32>
    %263 = arith.addf %261, %262 : vector<16x32xf32>
    %264 = math.tanh %263 : vector<16x32xf32>
    %265 = arith.mulf %260, %264 : vector<16x32xf32>
    %266 = arith.truncf %265 : vector<16x32xf32> to vector<16x32xbf16>
    %cst_54 = arith.constant dense<0.000000e+00> : vector<16x128xf32>
    %267 = tpu.matmul %266, %2, %cst_54 {dimension_numbers = #tpu.dot_dimension_numbers<[1], [0], [0], [1], [0, 0, 1, 1], [], []>} : vector<16x32xbf16>, vector<32x128xbf16>, vector<16x128xf32> -> vector<16x128xf32>
    %268 = arith.truncf %245 : vector<16x32xf32> to vector<16x32xbf16>
    %cst_55 = arith.constant dense<0.000000e+00> : vector<16x128xf32>
    %269 = tpu.matmul %268, %3, %cst_55 {dimension_numbers = #tpu.dot_dimension_numbers<[1], [0], [0], [1], [0, 0, 1, 1], [], []>} : vector<16x32xbf16>, vector<32x128xbf16>, vector<16x128xf32> -> vector<16x128xf32>
    %270 = arith.addf %267, %269 : vector<16x128xf32>
    %271 = vector.extract_strided_slice %4 {offsets = [1, 0], sizes = [1, 128], strides = [1, 1]} : vector<2x128xf32> to vector<1x128xf32>
    %272 = vector.broadcast %271 : vector<1x128xf32> to vector<16x128xf32>
    %273 = arith.addf %270, %272 : vector<16x128xf32>
    %274 = arith.mulf %273, %21 : vector<16x128xf32>
    %275 = math.tanh %274 : vector<16x128xf32>
    %cst_56 = arith.constant 1.000000e+00 : f32
    %276 = vector.broadcast %cst_56 : f32 to vector<16x128xf32>
    %277 = arith.addf %275, %276 : vector<16x128xf32>
    %cst_57 = arith.constant 5.000000e-01 : f32
    %278 = vector.broadcast %cst_57 : f32 to vector<16x128xf32>
    %279 = arith.mulf %278, %277 : vector<16x128xf32>
    %280 = arith.select %18, %275, %279 : vector<16x128xi1>, vector<16x128xf32>
    %281 = vector.extract_strided_slice %280 {offsets = [0, 0], sizes = [16, 32], strides = [1, 1]} : vector<16x128xf32> to vector<16x32xf32>
    %282 = vector.extract_strided_slice %280 {offsets = [0, 32], sizes = [16, 32], strides = [1, 1]} : vector<16x128xf32> to vector<16x32xf32>
    %283 = vector.extract_strided_slice %280 {offsets = [0, 64], sizes = [16, 32], strides = [1, 1]} : vector<16x128xf32> to vector<16x32xf32>
    %284 = vector.extract_strided_slice %280 {offsets = [0, 96], sizes = [16, 32], strides = [1, 1]} : vector<16x128xf32> to vector<16x32xf32>
    %285 = arith.mulf %282, %243 : vector<16x32xf32>
    %286 = arith.mulf %281, %283 : vector<16x32xf32>
    %287 = arith.addf %285, %286 : vector<16x32xf32>
    %288 = math.tanh %287 : vector<16x32xf32>
    %289 = arith.mulf %284, %288 : vector<16x32xf32>
    %290 = vector.extract_strided_slice %12 {offsets = [96, 0], sizes = [16, 128], strides = [1, 1]} : vector<128x128xf32> to vector<16x128xf32>
    %291 = arith.truncf %265 : vector<16x32xf32> to vector<16x32xbf16>
    %cst_58 = arith.constant dense<0.000000e+00> : vector<16x128xf32>
    %292 = tpu.matmul %291, %1, %cst_58 {dimension_numbers = #tpu.dot_dimension_numbers<[1], [0], [0], [1], [0, 0, 1, 1], [], []>} : vector<16x32xbf16>, vector<32x128xbf16>, vector<16x128xf32> -> vector<16x128xf32>
    %293 = arith.addf %290, %292 : vector<16x128xf32>
    %294 = arith.mulf %293, %21 : vector<16x128xf32>
    %295 = math.tanh %294 : vector<16x128xf32>
    %cst_59 = arith.constant 1.000000e+00 : f32
    %296 = vector.broadcast %cst_59 : f32 to vector<16x128xf32>
    %297 = arith.addf %295, %296 : vector<16x128xf32>
    %cst_60 = arith.constant 5.000000e-01 : f32
    %298 = vector.broadcast %cst_60 : f32 to vector<16x128xf32>
    %299 = arith.mulf %298, %297 : vector<16x128xf32>
    %300 = arith.select %18, %295, %299 : vector<16x128xi1>, vector<16x128xf32>
    %301 = vector.extract_strided_slice %300 {offsets = [0, 0], sizes = [16, 32], strides = [1, 1]} : vector<16x128xf32> to vector<16x32xf32>
    %302 = vector.extract_strided_slice %300 {offsets = [0, 32], sizes = [16, 32], strides = [1, 1]} : vector<16x128xf32> to vector<16x32xf32>
    %303 = vector.extract_strided_slice %300 {offsets = [0, 64], sizes = [16, 32], strides = [1, 1]} : vector<16x128xf32> to vector<16x32xf32>
    %304 = vector.extract_strided_slice %300 {offsets = [0, 96], sizes = [16, 32], strides = [1, 1]} : vector<16x128xf32> to vector<16x32xf32>
    %305 = arith.mulf %302, %263 : vector<16x32xf32>
    %306 = arith.mulf %301, %303 : vector<16x32xf32>
    %307 = arith.addf %305, %306 : vector<16x32xf32>
    %308 = math.tanh %307 : vector<16x32xf32>
    %309 = arith.mulf %304, %308 : vector<16x32xf32>
    %310 = arith.truncf %309 : vector<16x32xf32> to vector<16x32xbf16>
    %cst_61 = arith.constant dense<0.000000e+00> : vector<16x128xf32>
    %311 = tpu.matmul %310, %2, %cst_61 {dimension_numbers = #tpu.dot_dimension_numbers<[1], [0], [0], [1], [0, 0, 1, 1], [], []>} : vector<16x32xbf16>, vector<32x128xbf16>, vector<16x128xf32> -> vector<16x128xf32>
    %312 = arith.truncf %289 : vector<16x32xf32> to vector<16x32xbf16>
    %cst_62 = arith.constant dense<0.000000e+00> : vector<16x128xf32>
    %313 = tpu.matmul %312, %3, %cst_62 {dimension_numbers = #tpu.dot_dimension_numbers<[1], [0], [0], [1], [0, 0, 1, 1], [], []>} : vector<16x32xbf16>, vector<32x128xbf16>, vector<16x128xf32> -> vector<16x128xf32>
    %314 = arith.addf %311, %313 : vector<16x128xf32>
    %315 = vector.extract_strided_slice %4 {offsets = [1, 0], sizes = [1, 128], strides = [1, 1]} : vector<2x128xf32> to vector<1x128xf32>
    %316 = vector.broadcast %315 : vector<1x128xf32> to vector<16x128xf32>
    %317 = arith.addf %314, %316 : vector<16x128xf32>
    %318 = arith.mulf %317, %21 : vector<16x128xf32>
    %319 = math.tanh %318 : vector<16x128xf32>
    %cst_63 = arith.constant 1.000000e+00 : f32
    %320 = vector.broadcast %cst_63 : f32 to vector<16x128xf32>
    %321 = arith.addf %319, %320 : vector<16x128xf32>
    %cst_64 = arith.constant 5.000000e-01 : f32
    %322 = vector.broadcast %cst_64 : f32 to vector<16x128xf32>
    %323 = arith.mulf %322, %321 : vector<16x128xf32>
    %324 = arith.select %18, %319, %323 : vector<16x128xi1>, vector<16x128xf32>
    %325 = vector.extract_strided_slice %324 {offsets = [0, 0], sizes = [16, 32], strides = [1, 1]} : vector<16x128xf32> to vector<16x32xf32>
    %326 = vector.extract_strided_slice %324 {offsets = [0, 32], sizes = [16, 32], strides = [1, 1]} : vector<16x128xf32> to vector<16x32xf32>
    %327 = vector.extract_strided_slice %324 {offsets = [0, 64], sizes = [16, 32], strides = [1, 1]} : vector<16x128xf32> to vector<16x32xf32>
    %328 = vector.extract_strided_slice %324 {offsets = [0, 96], sizes = [16, 32], strides = [1, 1]} : vector<16x128xf32> to vector<16x32xf32>
    %329 = arith.mulf %326, %287 : vector<16x32xf32>
    %330 = arith.mulf %325, %327 : vector<16x32xf32>
    %331 = arith.addf %329, %330 : vector<16x32xf32>
    %332 = math.tanh %331 : vector<16x32xf32>
    %333 = arith.mulf %328, %332 : vector<16x32xf32>
    %334 = vector.extract_strided_slice %12 {offsets = [112, 0], sizes = [16, 128], strides = [1, 1]} : vector<128x128xf32> to vector<16x128xf32>
    %335 = arith.truncf %309 : vector<16x32xf32> to vector<16x32xbf16>
    %cst_65 = arith.constant dense<0.000000e+00> : vector<16x128xf32>
    %336 = tpu.matmul %335, %1, %cst_65 {dimension_numbers = #tpu.dot_dimension_numbers<[1], [0], [0], [1], [0, 0, 1, 1], [], []>} : vector<16x32xbf16>, vector<32x128xbf16>, vector<16x128xf32> -> vector<16x128xf32>
    %337 = arith.addf %334, %336 : vector<16x128xf32>
    %338 = arith.mulf %337, %21 : vector<16x128xf32>
    %339 = math.tanh %338 : vector<16x128xf32>
    %cst_66 = arith.constant 1.000000e+00 : f32
    %340 = vector.broadcast %cst_66 : f32 to vector<16x128xf32>
    %341 = arith.addf %339, %340 : vector<16x128xf32>
    %cst_67 = arith.constant 5.000000e-01 : f32
    %342 = vector.broadcast %cst_67 : f32 to vector<16x128xf32>
    %343 = arith.mulf %342, %341 : vector<16x128xf32>
    %344 = arith.select %18, %339, %343 : vector<16x128xi1>, vector<16x128xf32>
    %345 = vector.extract_strided_slice %344 {offsets = [0, 0], sizes = [16, 32], strides = [1, 1]} : vector<16x128xf32> to vector<16x32xf32>
    %346 = vector.extract_strided_slice %344 {offsets = [0, 32], sizes = [16, 32], strides = [1, 1]} : vector<16x128xf32> to vector<16x32xf32>
    %347 = vector.extract_strided_slice %344 {offsets = [0, 64], sizes = [16, 32], strides = [1, 1]} : vector<16x128xf32> to vector<16x32xf32>
    %348 = vector.extract_strided_slice %344 {offsets = [0, 96], sizes = [16, 32], strides = [1, 1]} : vector<16x128xf32> to vector<16x32xf32>
    %349 = arith.mulf %346, %307 : vector<16x32xf32>
    %350 = arith.mulf %345, %347 : vector<16x32xf32>
    %351 = arith.addf %349, %350 : vector<16x32xf32>
    %352 = math.tanh %351 : vector<16x32xf32>
    %353 = arith.mulf %348, %352 : vector<16x32xf32>
    %354 = arith.truncf %353 : vector<16x32xf32> to vector<16x32xbf16>
    %cst_68 = arith.constant dense<0.000000e+00> : vector<16x128xf32>
    %355 = tpu.matmul %354, %2, %cst_68 {dimension_numbers = #tpu.dot_dimension_numbers<[1], [0], [0], [1], [0, 0, 1, 1], [], []>} : vector<16x32xbf16>, vector<32x128xbf16>, vector<16x128xf32> -> vector<16x128xf32>
    %356 = arith.truncf %333 : vector<16x32xf32> to vector<16x32xbf16>
    %cst_69 = arith.constant dense<0.000000e+00> : vector<16x128xf32>
    %357 = tpu.matmul %356, %3, %cst_69 {dimension_numbers = #tpu.dot_dimension_numbers<[1], [0], [0], [1], [0, 0, 1, 1], [], []>} : vector<16x32xbf16>, vector<32x128xbf16>, vector<16x128xf32> -> vector<16x128xf32>
    %358 = arith.addf %355, %357 : vector<16x128xf32>
    %359 = vector.extract_strided_slice %4 {offsets = [1, 0], sizes = [1, 128], strides = [1, 1]} : vector<2x128xf32> to vector<1x128xf32>
    %360 = vector.broadcast %359 : vector<1x128xf32> to vector<16x128xf32>
    %361 = arith.addf %358, %360 : vector<16x128xf32>
    %362 = arith.mulf %361, %21 : vector<16x128xf32>
    %363 = math.tanh %362 : vector<16x128xf32>
    %cst_70 = arith.constant 1.000000e+00 : f32
    %364 = vector.broadcast %cst_70 : f32 to vector<16x128xf32>
    %365 = arith.addf %363, %364 : vector<16x128xf32>
    %cst_71 = arith.constant 5.000000e-01 : f32
    %366 = vector.broadcast %cst_71 : f32 to vector<16x128xf32>
    %367 = arith.mulf %366, %365 : vector<16x128xf32>
    %368 = arith.select %18, %363, %367 : vector<16x128xi1>, vector<16x128xf32>
    %369 = vector.extract_strided_slice %368 {offsets = [0, 0], sizes = [16, 32], strides = [1, 1]} : vector<16x128xf32> to vector<16x32xf32>
    %370 = vector.extract_strided_slice %368 {offsets = [0, 32], sizes = [16, 32], strides = [1, 1]} : vector<16x128xf32> to vector<16x32xf32>
    %371 = vector.extract_strided_slice %368 {offsets = [0, 64], sizes = [16, 32], strides = [1, 1]} : vector<16x128xf32> to vector<16x32xf32>
    %372 = vector.extract_strided_slice %368 {offsets = [0, 96], sizes = [16, 32], strides = [1, 1]} : vector<16x128xf32> to vector<16x32xf32>
    %373 = arith.mulf %370, %331 : vector<16x32xf32>
    %374 = arith.mulf %369, %371 : vector<16x32xf32>
    %375 = arith.addf %373, %374 : vector<16x32xf32>
    %376 = math.tanh %375 : vector<16x32xf32>
    %377 = arith.mulf %372, %376 : vector<16x32xf32>
    %378 = tpu.concatenate %353, %351 in 1 : vector<16x32xf32>, vector<16x32xf32> -> vector<16x64xf32>
    %379 = tpu.concatenate %377, %375 in 1 : vector<16x32xf32>, vector<16x32xf32> -> vector<16x64xf32>
    %380 = tpu.concatenate %378, %379 in 1 : vector<16x64xf32>, vector<16x64xf32> -> vector<16x128xf32>
    %381 = math.tanh %380 : vector<16x128xf32>
    %382 = arith.truncf %381 : vector<16x128xf32> to vector<16x128xbf16>
    %c0_72 = arith.constant 0 : index
    %c0_73 = arith.constant 0 : index
    %383 = vector.load %arg3[%c0_72, %c0_73] : memref<128x32xbf16, #tpu.memory_space<vmem>>, vector<128x32xbf16>
    %cst_74 = arith.constant dense<0.000000e+00> : vector<16x32xf32>
    %384 = tpu.matmul %382, %383, %cst_74 {dimension_numbers = #tpu.dot_dimension_numbers<[1], [0], [0], [1], [0, 0, 1, 1], [], []>} : vector<16x128xbf16>, vector<128x32xbf16>, vector<16x32xf32> -> vector<16x32xf32>
    %c0_75 = arith.constant 0 : index
    %c0_76 = arith.constant 0 : index
    %385 = vector.load %arg5[%c0_75, %c0_76] : memref<1x32xf32, #tpu.memory_space<vmem>>, vector<1x32xf32>
    %386 = vector.broadcast %385 : vector<1x32xf32> to vector<16x32xf32>
    %387 = arith.addf %384, %386 : vector<16x32xf32>
    %c0_77 = arith.constant 0 : index
    %c0_78 = arith.constant 0 : index
    %388 = vector.load %arg6[%c0_77, %c0_78] : memref<16x32xf32, #tpu.memory_space<vmem>>, vector<16x32xf32>
    tpu.vector_store %arg6[%c0_77, %c0_78], %387 {strides = array<i32>} : memref<16x32xf32, #tpu.memory_space<vmem>>, vector<16x32xf32>,
    return
  }
}

</mosaic_0001>

<llo_original>
// kernel: tpu_custom_call.1
$region0: #{tpu_custom_call.1}
  #allocation0 [shape = 'u32[]', space=smem, size = 0x4, offset = 0x4, fixed_abs, tag = 'smem constant byte address 0x4 - core index']
  #allocation1 [shape = 'u32[144,128]{1,0:T(1,128)}', space=vmem, size = 0x12000, scoped, tag = 'internal scratch']
  %s0 = inlined_call_operand.vmem [shape: bf16[128,32], index: 0, kind: input, shape index: {}]
  %s1 = inlined_call_operand.vmem [shape: bf16[64,128], index: 1, kind: input, shape index: {}]
  %s2 = inlined_call_operand.vmem [shape: bf16[64,128], index: 2, kind: input, shape index: {}]
  %s3 = inlined_call_operand.vmem [shape: bf16[128,32], index: 3, kind: input, shape index: {}]
  %s4 = inlined_call_operand.vmem [shape: f32[2,128], index: 4, kind: input, shape index: {}]
  %s5 = inlined_call_operand.vmem [shape: f32[1,32], index: 5, kind: input, shape index: {}]
  %s6 = inlined_call_operand.hbm [shape: f32[16,32], index: 6, kind: output, shape index: {}]
  %s7 = sld [smem:[#allocation0]]
  $region34: #{tpu_custom_call.1} parent=0
    _
  %s9 = ssub.s32 1, %s7
  %s10 = scalar_select 0, %s9, %s7
  $region1: #{tpu_custom_call.1} parent=0
    #allocation2 [shape = 'u8[8192]{0}', space=vmem, size = 0x2000, scoped, tag = 'output window, operand 0, single buffered']
    #allocation3 [shape = 's32[1]{0}', space=sflag, size = 0x4, scoped, tag = 'scoped memory for tpu_custom_call.1']
    %11 = vsyncpa [#allocation3], 0
    // Predicated region
    $region2: #{tpu_custom_call.1} parent=1 // pred_check
      _
    $region3: #{tpu_custom_call.1} parent=1 // pred_check_branch
      %13 = sbr.rel (0) target = $region5
    $region4: #{tpu_custom_call.1} parent=1 // pred_region
      _
    $region5: #{tpu_custom_call.1} parent=1 // pred_fallthru
      _
    // Predicated region
    $region6: #{tpu_custom_call.1} parent=1 // pred_check
      _
    $region7: #{tpu_custom_call.1} parent=1 // pred_check_branch
      %15 = sbr.rel (0) target = $region9
    $region8: #{tpu_custom_call.1} parent=1 // pred_region
      _
    $region9: #{tpu_custom_call.1} parent=1 // pred_fallthru
      _
    // Predicated region
    $region10: #{tpu_custom_call.1} parent=1 // pred_check
      _
    $region11: #{tpu_custom_call.1} parent=1 // pred_check_branch
      %17 = sbr.rel (0) target = $region13
    $region12: #{tpu_custom_call.1} parent=1 // pred_region
      _
    $region13: #{tpu_custom_call.1} parent=1 // pred_fallthru
      _
    // Predicated region
    $region14: #{tpu_custom_call.1} parent=1 // pred_check
      _
    $region15: #{tpu_custom_call.1} parent=1 // pred_check_branch
      %19 = sbr.rel (0) target = $region17
    $region16: #{tpu_custom_call.1} parent=1 // pred_region
      _
    $region17: #{tpu_custom_call.1} parent=1 // pred_fallthru
      _
    // Predicated region
    $region18: #{tpu_custom_call.1} parent=1 // pred_check
      _
    $region19: #{tpu_custom_call.1} parent=1 // pred_check_branch
      %21 = sbr.rel (0) target = $region21
    $region20: #{tpu_custom_call.1} parent=1 // pred_region
      _
    $region21: #{tpu_custom_call.1} parent=1 // pred_fallthru
      _
    // Predicated region
    $region22: #{tpu_custom_call.1} parent=1 // pred_check
      _
    $region23: #{tpu_custom_call.1} parent=1 // pred_check_branch
      %23 = sbr.rel (0) target = $region25
    $region24: #{tpu_custom_call.1} parent=1 // pred_region
      _
    $region25: #{tpu_custom_call.1} parent=1 // pred_fallthru
      _
    %v25 = vld [vmem:[%s1] sm:$0xf]
    %v26 = vld [vmem:[%s1 + $0x4] sm:$0xf]
    %v27 = vld [vmem:[%s1 + $0x8] sm:$0xf]
    %v28 = vld [vmem:[%s1 + $0xc] sm:$0xf]
    %v29 = vld [vmem:[%s1 + $0x10] sm:$0xf]
    %v30 = vld [vmem:[%s1 + $0x14] sm:$0xf]
    %v31 = vld [vmem:[%s1 + $0x18] sm:$0xf]
    %v32 = vld [vmem:[%s1 + $0x1c] sm:$0xf]
    %v33 = vld [vmem:[%s2] sm:$0xf]
    %v34 = vld [vmem:[%s2 + $0x4] sm:$0xf]
    %v35 = vld [vmem:[%s2 + $0x8] sm:$0xf]
    %v36 = vld [vmem:[%s2 + $0xc] sm:$0xf]
    %v37 = vld [vmem:[%s2 + $0x10] sm:$0xf]
    %v38 = vld [vmem:[%s2 + $0x14] sm:$0xf]
    %v39 = vld [vmem:[%s2 + $0x18] sm:$0xf]
    %v40 = vld [vmem:[%s2 + $0x1c] sm:$0xf]
    %v41 = vld [vmem:[%s4] sm:$0x3]
    %v42 = vld [vmem:[%s0] sm:$0xf]
    %v43 = vld [vmem:[%s0 + $0x4] sm:$0xf]
    %v44 = vld [vmem:[%s0 + $0x8] sm:$0xf]
    %v45 = vld [vmem:[%s0 + $0xc] sm:$0xf]
    %v46 = vld [vmem:[%s0 + $0x10] sm:$0xf]
    %v47 = vld [vmem:[%s0 + $0x14] sm:$0xf]
    %v48 = vld [vmem:[%s0 + $0x18] sm:$0xf]
    %v49 = vld [vmem:[%s0 + $0x1c] sm:$0xf]
    %v50 = vld [vmem:[%s0 + $0x20] sm:$0xf]
    %v51 = vld [vmem:[%s0 + $0x24] sm:$0xf]
    %v52 = vld [vmem:[%s0 + $0x28] sm:$0xf]
    %v53 = vld [vmem:[%s0 + $0x2c] sm:$0xf]
    %v54 = vld [vmem:[%s0 + $0x30] sm:$0xf]
    %v55 = vld [vmem:[%s0 + $0x34] sm:$0xf]
    %v56 = vld [vmem:[%s0 + $0x38] sm:$0xf]
    %v57 = vld [vmem:[%s0 + $0x3c] sm:$0xf]
    %v58 = vunpack.c.l.bf16 %v42
    %v59 = vunpack.c.l.bf16 %v43
    %v60 = vunpack.c.l.bf16 %v44
    %v61 = vunpack.c.l.bf16 %v45
    %v62 = vunpack.c.l.bf16 %v46
    %v63 = vunpack.c.l.bf16 %v47
    %v64 = vunpack.c.l.bf16 %v48
    %v65 = vunpack.c.l.bf16 %v49
    %v66 = vunpack.c.l.bf16 %v50
    %v67 = vunpack.c.l.bf16 %v51
    %v68 = vunpack.c.l.bf16 %v52
    %v69 = vunpack.c.l.bf16 %v53
    %v70 = vunpack.c.l.bf16 %v54
    %v71 = vunpack.c.l.bf16 %v55
    %v72 = vunpack.c.l.bf16 %v56
    %v73 = vunpack.c.l.bf16 %v57
    %v74 = vtanh.pop %v58
    %v75 = vtanh.pop %v59
    %v76 = vtanh.pop %v60
    %v77 = vtanh.pop %v61
    %v78 = vtanh.pop %v62
    %v79 = vtanh.pop %v63
    %v80 = vtanh.pop %v64
    %v81 = vtanh.pop %v65
    %v82 = vtanh.pop %v66
    %v83 = vtanh.pop %v67
    %v84 = vtanh.pop %v68
    %v85 = vtanh.pop %v69
    %v86 = vtanh.pop %v70
    %v87 = vtanh.pop %v71
    %v88 = vtanh.pop %v72
    %v89 = vtanh.pop %v73
    %v90 = vpack.c.bf16 %v75, %v74
    %v91 = vpack.c.bf16 %v77, %v76
    %v92 = vpack.c.bf16 %v79, %v78
    %v93 = vpack.c.bf16 %v81, %v80
    %v94 = vpack.c.bf16 %v83, %v82
    %v95 = vpack.c.bf16 %v85, %v84
    %v96 = vpack.c.bf16 %v87, %v86
    %v97 = vpack.c.bf16 %v89, %v88
    %v98 = vlaneseq
    %v99 = vshrl.u32 %v98, 7
    %v100 = vsub.s32 0, %v99
    %v101 = vrot.slane %v41, %v100
    %v106 = vunpack.c.l.b16 %v25
    %v107 = vunpack.c.l.b16 %v26
    %v108 = vunpack.c.l.b16 %v27
    %v109 = vunpack.c.l.b16 %v28
    %v110 = vpack.c.b16 %v107, %v106
    %v111 = vpack.c.b16 %v109, %v108
    %vm114 = vcmask 261120
    %v116 = vsel %vm114, %v90, 0
    %v119 = vsel %vm114, %v91, 0
    %v122 = vsel %vm114, %v92, 0
    %v125 = vsel %vm114, %v93, 0
    %v128 = vsel %vm114, %v94, 0
    %v131 = vsel %vm114, %v95, 0
    %v134 = vsel %vm114, %v96, 0
    %v137 = vsel %vm114, %v97, 0
    %139 = vmatprep.subr.bf16.mxu0 0
    %140 = vmatpush1.bf16.msra.mxu0 %v110
    %141 = vmatprep.subr.bf16.mxu0 0
    %142 = vmatpush1.bf16.msra.mxu0 %v111
    %143 = vmatprep.subr.bf16.mxu0 0
    %144 = vmatpush1.bf16.msra.mxu0 0
    %145 = vmatprep.subr.bf16.mxu0 0
    %146 = vmatpush1.bf16.msra.mxu0 0
    %147 = vmatprep.subr.bf16.mxu0 0
    %148 = vmatpush1.bf16.msra.mxu0 0
    %149 = vmatprep.subr.bf16.mxu0 0
    %150 = vmatpush1.bf16.msra.mxu0 0
    %151 = vmatprep.subr.bf16.mxu0 0
    %152 = vmatpush1.bf16.msra.mxu0 0
    %153 = vmatprep.subr.bf16.mxu0 0
    %154 = vmatpush1.bf16.msra.mxu0 0
    %155 = vmatprep.subr.bf16.mxu0 0
    %156 = vmatpush1.bf16.msra.mxu0 0
    %157 = vmatprep.subr.bf16.mxu0 0
    %158 = vmatpush1.bf16.msra.mxu0 0
    %159 = vmatprep.subr.bf16.mxu0 0
    %160 = vmatpush1.bf16.msra.mxu0 0
    %161 = vmatprep.subr.bf16.mxu0 0
    %162 = vmatpush1.bf16.msra.mxu0 0
    %163 = vmatprep.subr.bf16.mxu0 0
    %164 = vmatpush1.bf16.msra.mxu0 0
    %165 = vmatprep.subr.bf16.mxu0 0
    %166 = vmatpush1.bf16.msra.mxu0 0
    %167 = vmatprep.subr.bf16.mxu0 0
    %168 = vmatpush1.bf16.msra.mxu0 0
    %169 = vmatprep.subr.bf16.mxu0 0
    %170 = vmatpush1.bf16.msra.mxu0 0
    %171 = vmatprep.mubr.bf16.mxu0 0
    %172 = vmatmul.mubr.bf16.gmra.mrb[0].mxu0 %v116
    %v173 = vpop.f32.mrb[0].mxu0
    %v174 = vadd.f32 %v101, %v173
    %v175 = vpop.f32.mrb[0].mxu0
    %v176 = vpop.f32.mrb[0].mxu0
    %v177 = vadd.f32 %v101, %v176
    %v178 = vpop.f32.mrb[0].mxu0
    %179 = vmatprep.mubr.bf16.mxu0 0
    %180 = vmatmul.mubr.bf16.gmra.mrb[0].mxu0 %v119
    %v181 = vpop.f32.mrb[0].mxu0
    %v182 = vadd.f32 %v101, %v181
    %v183 = vpop.f32.mrb[0].mxu0
    %v184 = vpop.f32.mrb[0].mxu0
    %v185 = vadd.f32 %v101, %v184
    %v186 = vpop.f32.mrb[0].mxu0
    %187 = vmatprep.mubr.bf16.mxu0 0
    %188 = vmatmul.mubr.bf16.gmra.mrb[0].mxu0 %v122
    %v189 = vpop.f32.mrb[0].mxu0
    %v190 = vadd.f32 %v101, %v189
    %v191 = vpop.f32.mrb[0].mxu0
    %v192 = vpop.f32.mrb[0].mxu0
    %v193 = vadd.f32 %v101, %v192
    %v194 = vpop.f32.mrb[0].mxu0
    %195 = vmatprep.mubr.bf16.mxu0 0
    %196 = vmatmul.mubr.bf16.gmra.mrb[0].mxu0 %v125
    %v197 = vpop.f32.mrb[0].mxu0
    %v198 = vadd.f32 %v101, %v197
    %v199 = vpop.f32.mrb[0].mxu0
    %v200 = vpop.f32.mrb[0].mxu0
    %v201 = vadd.f32 %v101, %v200
    %v202 = vpop.f32.mrb[0].mxu0
    %203 = vmatprep.mubr.bf16.mxu0 0
    %204 = vmatmul.mubr.bf16.gmra.mrb[0].mxu0 %v128
    %v205 = vpop.f32.mrb[0].mxu0
    %v206 = vadd.f32 %v101, %v205
    %v207 = vpop.f32.mrb[0].mxu0
    %v208 = vpop.f32.mrb[0].mxu0
    %v209 = vadd.f32 %v101, %v208
    %v210 = vpop.f32.mrb[0].mxu0
    %211 = vmatprep.mubr.bf16.mxu0 0
    %212 = vmatmul.mubr.bf16.gmra.mrb[0].mxu0 %v131
    %v213 = vpop.f32.mrb[0].mxu0
    %v214 = vadd.f32 %v101, %v213
    %v215 = vpop.f32.mrb[0].mxu0
    %v216 = vpop.f32.mrb[0].mxu0
    %v217 = vadd.f32 %v101, %v216
    %v218 = vpop.f32.mrb[0].mxu0
    %219 = vmatprep.mubr.bf16.mxu0 0
    %220 = vmatmul.mubr.bf16.gmra.mrb[0].mxu0 %v134
    %v221 = vpop.f32.mrb[0].mxu0
    %v222 = vadd.f32 %v101, %v221
    %v223 = vpop.f32.mrb[0].mxu0
    %v224 = vpop.f32.mrb[0].mxu0
    %v225 = vadd.f32 %v101, %v224
    %v226 = vpop.f32.mrb[0].mxu0
    %227 = vmatprep.mubr.bf16.mxu0 0
    %228 = vmatmul.mubr.bf16.gmra.mrb[0].mxu0 %v137
    %v229 = vpop.f32.mrb[0].mxu0
    %v230 = vadd.f32 %v101, %v229
    %v231 = vpop.f32.mrb[0].mxu0
    %v232 = vpop.f32.mrb[0].mxu0
    %v233 = vadd.f32 %v101, %v232
    %v234 = vpop.f32.mrb[0].mxu0
    %235 = vdwg.mxu0
    %v236 = vlaneseq
    %v237 = vand.u32 %v236, 127
    %vm238 = vcmp.ge.s32.totalorder %v237, 64
    %vm239 = vcmp.lt.s32.totalorder %v237, 96
    %vm240 = vmand %vm238, %vm239
    %v241 = vsel %vm240, 1.0, 0.5
    %v246 = vunpack.c.l.b16 %v29
    %v247 = vunpack.c.l.b16 %v30
    %v248 = vunpack.c.l.b16 %v31
    %v249 = vunpack.c.l.b16 %v32
    %v250 = vpack.c.b16 %v247, %v246
    %v251 = vpack.c.b16 %v249, %v248
    %v255 = vsel %vm114, 0, 0
    %257 = vmatprep.subr.bf16.mxu0 0
    %258 = vmatpush1.bf16.msra.mxu0 %v250
    %259 = vmatprep.subr.bf16.mxu0 0
    %260 = vmatpush1.bf16.msra.mxu0 %v251
    %261 = vmatprep.subr.bf16.mxu0 0
    %262 = vmatpush1.bf16.msra.mxu0 0
    %263 = vmatprep.subr.bf16.mxu0 0
    %264 = vmatpush1.bf16.msra.mxu0 0
    %265 = vmatprep.subr.bf16.mxu0 0
    %266 = vmatpush1.bf16.msra.mxu0 0
    %267 = vmatprep.subr.bf16.mxu0 0
    %268 = vmatpush1.bf16.msra.mxu0 0
    %269 = vmatprep.subr.bf16.mxu0 0
    %270 = vmatpush1.bf16.msra.mxu0 0
    %271 = vmatprep.subr.bf16.mxu0 0
    %272 = vmatpush1.bf16.msra.mxu0 0
    %273 = vmatprep.subr.bf16.mxu0 0
    %274 = vmatpush1.bf16.msra.mxu0 0
    %275 = vmatprep.subr.bf16.mxu0 0
    %276 = vmatpush1.bf16.msra.mxu0 0
    %277 = vmatprep.subr.bf16.mxu0 0
    %278 = vmatpush1.bf16.msra.mxu0 0
    %279 = vmatprep.subr.bf16.mxu0 0
    %280 = vmatpush1.bf16.msra.mxu0 0
    %281 = vmatprep.subr.bf16.mxu0 0
    %282 = vmatpush1.bf16.msra.mxu0 0
    %283 = vmatprep.subr.bf16.mxu0 0
    %284 = vmatpush1.bf16.msra.mxu0 0
    %285 = vmatprep.subr.bf16.mxu0 0
    %286 = vmatpush1.bf16.msra.mxu0 0
    %287 = vmatprep.subr.bf16.mxu0 0
    %288 = vmatpush1.bf16.msra.mxu0 0
    %289 = vmatprep.mubr.bf16.mxu0 0
    %290 = vmatmul.mubr.bf16.gmra.mrb[0].mxu0 %v255
    %v291 = vpop.f32.mrb[0].mxu0
    %v292 = vadd.f32 0.0, %v291
    %v293 = vpop.f32.mrb[0].mxu0
    %v294 = vpop.f32.mrb[0].mxu0
    %v295 = vadd.f32 0.0, %v294
    %v296 = vpop.f32.mrb[0].mxu0
    %297 = vdwg.mxu0
    %v298 = vadd.f32 %v174, %v292
    %v299 = vadd.f32 %v177, %v295
    %v300 = vmul.f32 %v298, %v241
    %v301 = vmul.f32 %v299, %v241
    %v302 = vtanh.pop %v300
    %v303 = vtanh.pop %v301
    %v304 = vadd.f32 %v302, 1.0
    %v305 = vadd.f32 %v303, 1.0
    %v306 = vmul.f32 %v304, 0.5
    %v307 = vmul.f32 %v305, 0.5
    %v308 = vsel %vm240, %v302, %v306
    %v309 = vsel %vm240, %v303, %v307
    %v310 = vmul.f32 %v308, 0.0
    %v311 = vmul.f32 %v309, 0.0
    %314 = vrot.lane.b32.xlu0 %v308, 64
    %v315 = vpop.permute.xlu0 %314
    %316 = vrot.lane.b32.xlu0 %v309, 64
    %v317 = vpop.permute.xlu0 %316
    %v320 = vmul.f32 %v308, %v315
    %v321 = vmul.f32 %v309, %v317
    %324 = vrot.lane.b32.xlu0 %v320, 32
    %v325 = vpop.permute.xlu0 %324
    %326 = vrot.lane.b32.xlu0 %v321, 32
    %v327 = vpop.permute.xlu0 %326
    %v330 = vadd.f32 %v310, %v325
    %v331 = vadd.f32 %v311, %v327
    %v332 = vtanh.pop %v330
    %v333 = vtanh.pop %v331
    %336 = vrot.lane.b32.xlu0 %v332, 64
    %v337 = vpop.permute.xlu0 %336
    %338 = vrot.lane.b32.xlu0 %v333, 64
    %v339 = vpop.permute.xlu0 %338
    %v342 = vmul.f32 %v308, %v337
    %v343 = vmul.f32 %v309, %v339
    %v344 = vpack.c.bf16 %v343, %v342
    %v349 = vunpack.c.l.b16 %v37
    %v350 = vunpack.c.l.b16 %v38
    %v351 = vunpack.c.l.b16 %v39
    %v352 = vunpack.c.l.b16 %v40
    %v353 = vpack.c.b16 %v350, %v349
    %v354 = vpack.c.b16 %v352, %v351
    %357 = vmatprep.subr.bf16.mxu0 0
    %358 = vmatpush1.bf16.msra.mxu0 %v353
    %359 = vmatprep.subr.bf16.mxu0 0
    %360 = vmatpush1.bf16.msra.mxu0 %v354
    %361 = vmatprep.subr.bf16.mxu0 0
    %362 = vmatpush1.bf16.msra.mxu0 0
    %363 = vmatprep.subr.bf16.mxu0 0
    %364 = vmatpush1.bf16.msra.mxu0 0
    %365 = vmatprep.subr.bf16.mxu0 0
    %366 = vmatpush1.bf16.msra.mxu0 0
    %367 = vmatprep.subr.bf16.mxu0 0
    %368 = vmatpush1.bf16.msra.mxu0 0
    %369 = vmatprep.subr.bf16.mxu0 0
    %370 = vmatpush1.bf16.msra.mxu0 0
    %371 = vmatprep.subr.bf16.mxu0 0
    %372 = vmatpush1.bf16.msra.mxu0 0
    %373 = vmatprep.subr.bf16.mxu0 0
    %374 = vmatpush1.bf16.msra.mxu0 0
    %375 = vmatprep.subr.bf16.mxu0 0
    %376 = vmatpush1.bf16.msra.mxu0 0
    %377 = vmatprep.subr.bf16.mxu0 0
    %378 = vmatpush1.bf16.msra.mxu0 0
    %379 = vmatprep.subr.bf16.mxu0 0
    %380 = vmatpush1.bf16.msra.mxu0 0
    %381 = vmatprep.subr.bf16.mxu0 0
    %382 = vmatpush1.bf16.msra.mxu0 0
    %383 = vmatprep.subr.bf16.mxu0 0
    %384 = vmatpush1.bf16.msra.mxu0 0
    %385 = vmatprep.subr.bf16.mxu0 0
    %386 = vmatpush1.bf16.msra.mxu0 0
    %387 = vmatprep.subr.bf16.mxu0 0
    %388 = vmatpush1.bf16.msra.mxu0 0
    %389 = vmatprep.mubr.bf16.mxu0 0
    %390 = vmatmul.mubr.bf16.gmra.mrb[0].mxu0 %v255
    %v391 = vpop.f32.mrb[0].mxu0
    %v392 = vadd.f32 0.0, %v391
    %v393 = vpop.f32.mrb[0].mxu0
    %v394 = vpop.f32.mrb[0].mxu0
    %v395 = vadd.f32 0.0, %v394
    %v396 = vpop.f32.mrb[0].mxu0
    %397 = vdwg.mxu0
    %399 = vrot.lane.b32.xlu0 %v344, 32
    %v400 = vpop.permute.xlu0 %399
    %v405 = vunpack.c.l.b16 %v33
    %v406 = vunpack.c.l.b16 %v34
    %v407 = vunpack.c.l.b16 %v35
    %v408 = vunpack.c.l.b16 %v36
    %v409 = vpack.c.b16 %v406, %v405
    %v410 = vpack.c.b16 %v408, %v407
    %v414 = vsel %vm114, %v400, 0
    %416 = vmatprep.subr.bf16.mxu0 0
    %417 = vmatpush1.bf16.msra.mxu0 %v409
    %418 = vmatprep.subr.bf16.mxu0 0
    %419 = vmatpush1.bf16.msra.mxu0 %v410
    %420 = vmatprep.subr.bf16.mxu0 0
    %421 = vmatpush1.bf16.msra.mxu0 0
    %422 = vmatprep.subr.bf16.mxu0 0
    %423 = vmatpush1.bf16.msra.mxu0 0
    %424 = vmatprep.subr.bf16.mxu0 0
    %425 = vmatpush1.bf16.msra.mxu0 0
    %426 = vmatprep.subr.bf16.mxu0 0
    %427 = vmatpush1.bf16.msra.mxu0 0
    %428 = vmatprep.subr.bf16.mxu0 0
    %429 = vmatpush1.bf16.msra.mxu0 0
    %430 = vmatprep.subr.bf16.mxu0 0
    %431 = vmatpush1.bf16.msra.mxu0 0
    %432 = vmatprep.subr.bf16.mxu0 0
    %433 = vmatpush1.bf16.msra.mxu0 0
    %434 = vmatprep.subr.bf16.mxu0 0
    %435 = vmatpush1.bf16.msra.mxu0 0
    %436 = vmatprep.subr.bf16.mxu0 0
    %437 = vmatpush1.bf16.msra.mxu0 0
    %438 = vmatprep.subr.bf16.mxu0 0
    %439 = vmatpush1.bf16.msra.mxu0 0
    %440 = vmatprep.subr.bf16.mxu0 0
    %441 = vmatpush1.bf16.msra.mxu0 0
    %442 = vmatprep.subr.bf16.mxu0 0
    %443 = vmatpush1.bf16.msra.mxu0 0
    %444 = vmatprep.subr.bf16.mxu0 0
    %445 = vmatpush1.bf16.msra.mxu0 0
    %446 = vmatprep.subr.bf16.mxu0 0
    %447 = vmatpush1.bf16.msra.mxu0 0
    %448 = vmatprep.mubr.bf16.mxu0 0
    %449 = vmatmul.mubr.bf16.gmra.mrb[0].mxu0 %v414
    %v450 = vpop.f32.mrb[0].mxu0
    %v451 = vadd.f32 %v392, %v450
    %v452 = vpop.f32.mrb[0].mxu0
    %v453 = vpop.f32.mrb[0].mxu0
    %v454 = vadd.f32 %v395, %v453
    %v455 = vpop.f32.mrb[0].mxu0
    %456 = vdwg.mxu0
    %v457 = vlaneseq
    %v458 = vshrl.u32 %v457, 7
    %v459 = vsub.s32 1, %v458
    %v460 = vrot.slane %v41, %v459
    %v461 = vadd.f32 %v451, %v460
    %v462 = vadd.f32 %v454, %v460
    %v463 = vmul.f32 %v461, %v241
    %v464 = vmul.f32 %v462, %v241
    %v465 = vtanh.pop %v463
    %v466 = vtanh.pop %v464
    %v467 = vadd.f32 %v465, 1.0
    %v468 = vadd.f32 %v466, 1.0
    %v469 = vmul.f32 %v467, 0.5
    %v470 = vmul.f32 %v468, 0.5
    %v471 = vsel %vm240, %v465, %v469
    %v472 = vsel %vm240, %v466, %v470
    %v473 = vmul.f32 %v471, 0.0
    %v474 = vmul.f32 %v472, 0.0
    %477 = vrot.lane.b32.xlu0 %v471, 64
    %v478 = vpop.permute.xlu0 %477
    %479 = vrot.lane.b32.xlu0 %v472, 64
    %v480 = vpop.permute.xlu0 %479
    %v483 = vmul.f32 %v471, %v478
    %v484 = vmul.f32 %v472, %v480
    %487 = vrot.lane.b32.xlu0 %v483, 32
    %v488 = vpop.permute.xlu0 %487
    %489 = vrot.lane.b32.xlu0 %v484, 32
    %v490 = vpop.permute.xlu0 %489
    %v493 = vadd.f32 %v473, %v488
    %v494 = vadd.f32 %v474, %v490
    %v495 = vtanh.pop %v493
    %v496 = vtanh.pop %v494
    %499 = vrot.lane.b32.xlu0 %v495, 64
    %v500 = vpop.permute.xlu0 %499
    %501 = vrot.lane.b32.xlu0 %v496, 64
    %v502 = vpop.permute.xlu0 %501
    %v505 = vmul.f32 %v471, %v500
    %v506 = vmul.f32 %v472, %v502
    %507 = vmatprep.subr.bf16.mxu0 0
    %508 = vmatpush1.bf16.msra.mxu0 %v250
    %509 = vmatprep.subr.bf16.mxu0 0
    %510 = vmatpush1.bf16.msra.mxu0 %v251
    %511 = vmatprep.subr.bf16.mxu0 0
    %512 = vmatpush1.bf16.msra.mxu0 0
    %513 = vmatprep.subr.bf16.mxu0 0
    %514 = vmatpush1.bf16.msra.mxu0 0
    %515 = vmatprep.subr.bf16.mxu0 0
    %516 = vmatpush1.bf16.msra.mxu0 0
    %517 = vmatprep.subr.bf16.mxu0 0
    %518 = vmatpush1.bf16.msra.mxu0 0
    %519 = vmatprep.subr.bf16.mxu0 0
    %520 = vmatpush1.bf16.msra.mxu0 0
    %521 = vmatprep.subr.bf16.mxu0 0
    %522 = vmatpush1.bf16.msra.mxu0 0
    %523 = vmatprep.subr.bf16.mxu0 0
    %524 = vmatpush1.bf16.msra.mxu0 0
    %525 = vmatprep.subr.bf16.mxu0 0
    %526 = vmatpush1.bf16.msra.mxu0 0
    %527 = vmatprep.subr.bf16.mxu0 0
    %528 = vmatpush1.bf16.msra.mxu0 0
    %529 = vmatprep.subr.bf16.mxu0 0
    %530 = vmatpush1.bf16.msra.mxu0 0
    %531 = vmatprep.subr.bf16.mxu0 0
    %532 = vmatpush1.bf16.msra.mxu0 0
    %533 = vmatprep.subr.bf16.mxu0 0
    %534 = vmatpush1.bf16.msra.mxu0 0
    %535 = vmatprep.subr.bf16.mxu0 0
    %536 = vmatpush1.bf16.msra.mxu0 0
    %537 = vmatprep.subr.bf16.mxu0 0
    %538 = vmatpush1.bf16.msra.mxu0 0
    %539 = vmatprep.mubr.bf16.mxu0 0
    %540 = vmatmul.mubr.bf16.gmra.mrb[0].mxu0 %v414
    %v541 = vpop.f32.mrb[0].mxu0
    %v542 = vadd.f32 0.0, %v541
    %v543 = vpop.f32.mrb[0].mxu0
    %v544 = vpop.f32.mrb[0].mxu0
    %v545 = vadd.f32 0.0, %v544
    %v546 = vpop.f32.mrb[0].mxu0
    %547 = vdwg.mxu0
    %v548 = vadd.f32 %v182, %v542
    %v549 = vadd.f32 %v185, %v545
    %v550 = vmul.f32 %v548, %v241
    %v551 = vmul.f32 %v549, %v241
    %v552 = vtanh.pop %v550
    %v553 = vtanh.pop %v551
    %v554 = vadd.f32 %v552, 1.0
    %v555 = vadd.f32 %v553, 1.0
    %v556 = vmul.f32 %v554, 0.5
    %v557 = vmul.f32 %v555, 0.5
    %v558 = vsel %vm240, %v552, %v556
    %v559 = vsel %vm240, %v553, %v557
    %v560 = vmul.f32 %v558, %v330
    %v561 = vmul.f32 %v559, %v331
    %564 = vrot.lane.b32.xlu0 %v558, 64
    %v565 = vpop.permute.xlu0 %564
    %566 = vrot.lane.b32.xlu0 %v559, 64
    %v567 = vpop.permute.xlu0 %566
    %v570 = vmul.f32 %v558, %v565
    %v571 = vmul.f32 %v559, %v567
    %574 = vrot.lane.b32.xlu0 %v570, 32
    %v575 = vpop.permute.xlu0 %574
    %576 = vrot.lane.b32.xlu0 %v571, 32
    %v577 = vpop.permute.xlu0 %576
    %v580 = vadd.f32 %v560, %v575
    %v581 = vadd.f32 %v561, %v577
    %v582 = vtanh.pop %v580
    %v583 = vtanh.pop %v581
    %586 = vrot.lane.b32.xlu0 %v582, 64
    %v587 = vpop.permute.xlu0 %586
    %588 = vrot.lane.b32.xlu0 %v583, 64
    %v589 = vpop.permute.xlu0 %588
    %v592 = vmul.f32 %v558, %v587
    %v593 = vmul.f32 %v559, %v589
    %v594 = vpack.c.bf16 %v593, %v592
    %v595 = vpack.c.bf16 %v506, %v505
    %597 = vrot.lane.b32.xlu0 %v595, 32
    %v598 = vpop.permute.xlu0 %597
    %v600 = vsel %vm114, %v598, 0
    %602 = vmatprep.subr.bf16.mxu0 0
    %603 = vmatpush1.bf16.msra.mxu0 %v353
    %604 = vmatprep.subr.bf16.mxu0 0
    %605 = vmatpush1.bf16.msra.mxu0 %v354
    %606 = vmatprep.subr.bf16.mxu0 0
    %607 = vmatpush1.bf16.msra.mxu0 0
    %608 = vmatprep.subr.bf16.mxu0 0
    %609 = vmatpush1.bf16.msra.mxu0 0
    %610 = vmatprep.subr.bf16.mxu0 0
    %611 = vmatpush1.bf16.msra.mxu0 0
    %612 = vmatprep.subr.bf16.mxu0 0
    %613 = vmatpush1.bf16.msra.mxu0 0
    %614 = vmatprep.subr.bf16.mxu0 0
    %615 = vmatpush1.bf16.msra.mxu0 0
    %616 = vmatprep.subr.bf16.mxu0 0
    %617 = vmatpush1.bf16.msra.mxu0 0
    %618 = vmatprep.subr.bf16.mxu0 0
    %619 = vmatpush1.bf16.msra.mxu0 0
    %620 = vmatprep.subr.bf16.mxu0 0
    %621 = vmatpush1.bf16.msra.mxu0 0
    %622 = vmatprep.subr.bf16.mxu0 0
    %623 = vmatpush1.bf16.msra.mxu0 0
    %624 = vmatprep.subr.bf16.mxu0 0
    %625 = vmatpush1.bf16.msra.mxu0 0
    %626 = vmatprep.subr.bf16.mxu0 0
    %627 = vmatpush1.bf16.msra.mxu0 0
    %628 = vmatprep.subr.bf16.mxu0 0
    %629 = vmatpush1.bf16.msra.mxu0 0
    %630 = vmatprep.subr.bf16.mxu0 0
    %631 = vmatpush1.bf16.msra.mxu0 0
    %632 = vmatprep.subr.bf16.mxu0 0
    %633 = vmatpush1.bf16.msra.mxu0 0
    %634 = vmatprep.mubr.bf16.mxu0 0
    %635 = vmatmul.mubr.bf16.gmra.mrb[0].mxu0 %v600
    %v636 = vpop.f32.mrb[0].mxu0
    %v637 = vadd.f32 0.0, %v636
    %v638 = vpop.f32.mrb[0].mxu0
    %v639 = vpop.f32.mrb[0].mxu0
    %v640 = vadd.f32 0.0, %v639
    %v641 = vpop.f32.mrb[0].mxu0
    %642 = vdwg.mxu0
    %644 = vrot.lane.b32.xlu0 %v594, 32
    %v645 = vpop.permute.xlu0 %644
    %v647 = vsel %vm114, %v645, 0
    %649 = vmatprep.subr.bf16.mxu0 0
    %650 = vmatpush1.bf16.msra.mxu0 %v409
    %651 = vmatprep.subr.bf16.mxu0 0
    %652 = vmatpush1.bf16.msra.mxu0 %v410
    %653 = vmatprep.subr.bf16.mxu0 0
    %654 = vmatpush1.bf16.msra.mxu0 0
    %655 = vmatprep.subr.bf16.mxu0 0
    %656 = vmatpush1.bf16.msra.mxu0 0
    %657 = vmatprep.subr.bf16.mxu0 0
    %658 = vmatpush1.bf16.msra.mxu0 0
    %659 = vmatprep.subr.bf16.mxu0 0
    %660 = vmatpush1.bf16.msra.mxu0 0
    %661 = vmatprep.subr.bf16.mxu0 0
    %662 = vmatpush1.bf16.msra.mxu0 0
    %663 = vmatprep.subr.bf16.mxu0 0
    %664 = vmatpush1.bf16.msra.mxu0 0
    %665 = vmatprep.subr.bf16.mxu0 0
    %666 = vmatpush1.bf16.msra.mxu0 0
    %667 = vmatprep.subr.bf16.mxu0 0
    %668 = vmatpush1.bf16.msra.mxu0 0
    %669 = vmatprep.subr.bf16.mxu0 0
    %670 = vmatpush1.bf16.msra.mxu0 0
    %671 = vmatprep.subr.bf16.mxu0 0
    %672 = vmatpush1.bf16.msra.mxu0 0
    %673 = vmatprep.subr.bf16.mxu0 0
    %674 = vmatpush1.bf16.msra.mxu0 0
    %675 = vmatprep.subr.bf16.mxu0 0
    %676 = vmatpush1.bf16.msra.mxu0 0
    %677 = vmatprep.subr.bf16.mxu0 0
    %678 = vmatpush1.bf16.msra.mxu0 0
    %679 = vmatprep.subr.bf16.mxu0 0
    %680 = vmatpush1.bf16.msra.mxu0 0
    %681 = vmatprep.mubr.bf16.mxu0 0
    %682 = vmatmul.mubr.bf16.gmra.mrb[0].mxu0 %v647
    %v683 = vpop.f32.mrb[0].mxu0
    %v684 = vadd.f32 %v637, %v683
    %v685 = vpop.f32.mrb[0].mxu0
    %v686 = vpop.f32.mrb[0].mxu0
    %v687 = vadd.f32 %v640, %v686
    %v688 = vpop.f32.mrb[0].mxu0
    %689 = vdwg.mxu0
    %v690 = vadd.f32 %v684, %v460
    %v691 = vadd.f32 %v687, %v460
    %v692 = vmul.f32 %v690, %v241
    %v693 = vmul.f32 %v691, %v241
    %v694 = vtanh.pop %v692
    %v695 = vtanh.pop %v693
    %v696 = vadd.f32 %v694, 1.0
    %v697 = vadd.f32 %v695, 1.0
    %v698 = vmul.f32 %v696, 0.5
    %v699 = vmul.f32 %v697, 0.5
    %v700 = vsel %vm240, %v694, %v698
    %v701 = vsel %vm240, %v695, %v699
    %v702 = vmul.f32 %v700, %v493
    %v703 = vmul.f32 %v701, %v494
    %706 = vrot.lane.b32.xlu0 %v700, 64
    %v707 = vpop.permute.xlu0 %706
    %708 = vrot.lane.b32.xlu0 %v701, 64
    %v709 = vpop.permute.xlu0 %708
    %v712 = vmul.f32 %v700, %v707
    %v713 = vmul.f32 %v701, %v709
    %716 = vrot.lane.b32.xlu0 %v712, 32
    %v717 = vpop.permute.xlu0 %716
    %718 = vrot.lane.b32.xlu0 %v713, 32
    %v719 = vpop.permute.xlu0 %718
    %v722 = vadd.f32 %v702, %v717
    %v723 = vadd.f32 %v703, %v719
    %v724 = vtanh.pop %v722
    %v725 = vtanh.pop %v723
    %728 = vrot.lane.b32.xlu0 %v724, 64
    %v729 = vpop.permute.xlu0 %728
    %730 = vrot.lane.b32.xlu0 %v725, 64
    %v731 = vpop.permute.xlu0 %730
    %v734 = vmul.f32 %v700, %v729
    %v735 = vmul.f32 %v701, %v731
    %736 = vmatprep.subr.bf16.mxu0 0
    %737 = vmatpush1.bf16.msra.mxu0 %v250
    %738 = vmatprep.subr.bf16.mxu0 0
    %739 = vmatpush1.bf16.msra.mxu0 %v251
    %740 = vmatprep.subr.bf16.mxu0 0
    %741 = vmatpush1.bf16.msra.mxu0 0
    %742 = vmatprep.subr.bf16.mxu0 0
    %743 = vmatpush1.bf16.msra.mxu0 0
    %744 = vmatprep.subr.bf16.mxu0 0
    %745 = vmatpush1.bf16.msra.mxu0 0
    %746 = vmatprep.subr.bf16.mxu0 0
    %747 = vmatpush1.bf16.msra.mxu0 0
    %748 = vmatprep.subr.bf16.mxu0 0
    %749 = vmatpush1.bf16.msra.mxu0 0
    %750 = vmatprep.subr.bf16.mxu0 0
    %751 = vmatpush1.bf16.msra.mxu0 0
    %752 = vmatprep.subr.bf16.mxu0 0
    %753 = vmatpush1.bf16.msra.mxu0 0
    %754 = vmatprep.subr.bf16.mxu0 0
    %755 = vmatpush1.bf16.msra.mxu0 0
    %756 = vmatprep.subr.bf16.mxu0 0
    %757 = vmatpush1.bf16.msra.mxu0 0
    %758 = vmatprep.subr.bf16.mxu0 0
    %759 = vmatpush1.bf16.msra.mxu0 0
    %760 = vmatprep.subr.bf16.mxu0 0
    %761 = vmatpush1.bf16.msra.mxu0 0
    %762 = vmatprep.subr.bf16.mxu0 0
    %763 = vmatpush1.bf16.msra.mxu0 0
    %764 = vmatprep.subr.bf16.mxu0 0
    %765 = vmatpush1.bf16.msra.mxu0 0
    %766 = vmatprep.subr.bf16.mxu0 0
    %767 = vmatpush1.bf16.msra.mxu0 0
    %768 = vmatprep.mubr.bf16.mxu0 0
    %769 = vmatmul.mubr.bf16.gmra.mrb[0].mxu0 %v647
    %v770 = vpop.f32.mrb[0].mxu0
    %v771 = vadd.f32 0.0, %v770
    %v772 = vpop.f32.mrb[0].mxu0
    %v773 = vpop.f32.mrb[0].mxu0
    %v774 = vadd.f32 0.0, %v773
    %v775 = vpop.f32.mrb[0].mxu0
    %776 = vdwg.mxu0
    %v777 = vadd.f32 %v190, %v771
    %v778 = vadd.f32 %v193, %v774
    %v779 = vmul.f32 %v777, %v241
    %v780 = vmul.f32 %v778, %v241
    %v781 = vtanh.pop %v779
    %v782 = vtanh.pop %v780
    %v783 = vadd.f32 %v781, 1.0
    %v784 = vadd.f32 %v782, 1.0
    %v785 = vmul.f32 %v783, 0.5
    %v786 = vmul.f32 %v784, 0.5
    %v787 = vsel %vm240, %v781, %v785
    %v788 = vsel %vm240, %v782, %v786
    %v789 = vmul.f32 %v787, %v580
    %v790 = vmul.f32 %v788, %v581
    %793 = vrot.lane.b32.xlu0 %v787, 64
    %v794 = vpop.permute.xlu0 %793
    %795 = vrot.lane.b32.xlu0 %v788, 64
    %v796 = vpop.permute.xlu0 %795
    %v799 = vmul.f32 %v787, %v794
    %v800 = vmul.f32 %v788, %v796
    %803 = vrot.lane.b32.xlu0 %v799, 32
    %v804 = vpop.permute.xlu0 %803
    %805 = vrot.lane.b32.xlu0 %v800, 32
    %v806 = vpop.permute.xlu0 %805
    %v809 = vadd.f32 %v789, %v804
    %v810 = vadd.f32 %v790, %v806
    %v811 = vtanh.pop %v809
    %v812 = vtanh.pop %v810
    %815 = vrot.lane.b32.xlu0 %v811, 64
    %v816 = vpop.permute.xlu0 %815
    %817 = vrot.lane.b32.xlu0 %v812, 64
    %v818 = vpop.permute.xlu0 %817
    %v821 = vmul.f32 %v787, %v816
    %v822 = vmul.f32 %v788, %v818
    %v823 = vpack.c.bf16 %v822, %v821
    %v824 = vpack.c.bf16 %v735, %v734
    %826 = vrot.lane.b32.xlu0 %v824, 32
    %v827 = vpop.permute.xlu0 %826
    %v829 = vsel %vm114, %v827, 0
    %831 = vmatprep.subr.bf16.mxu0 0
    %832 = vmatpush1.bf16.msra.mxu0 %v353
    %833 = vmatprep.subr.bf16.mxu0 0
    %834 = vmatpush1.bf16.msra.mxu0 %v354
    %835 = vmatprep.subr.bf16.mxu0 0
    %836 = vmatpush1.bf16.msra.mxu0 0
    %837 = vmatprep.subr.bf16.mxu0 0
    %838 = vmatpush1.bf16.msra.mxu0 0
    %839 = vmatprep.subr.bf16.mxu0 0
    %840 = vmatpush1.bf16.msra.mxu0 0
    %841 = vmatprep.subr.bf16.mxu0 0
    %842 = vmatpush1.bf16.msra.mxu0 0
    %843 = vmatprep.subr.bf16.mxu0 0
    %844 = vmatpush1.bf16.msra.mxu0 0
    %845 = vmatprep.subr.bf16.mxu0 0
    %846 = vmatpush1.bf16.msra.mxu0 0
    %847 = vmatprep.subr.bf16.mxu0 0
    %848 = vmatpush1.bf16.msra.mxu0 0
    %849 = vmatprep.subr.bf16.mxu0 0
    %850 = vmatpush1.bf16.msra.mxu0 0
    %851 = vmatprep.subr.bf16.mxu0 0
    %852 = vmatpush1.bf16.msra.mxu0 0
    %853 = vmatprep.subr.bf16.mxu0 0
    %854 = vmatpush1.bf16.msra.mxu0 0
    %855 = vmatprep.subr.bf16.mxu0 0
    %856 = vmatpush1.bf16.msra.mxu0 0
    %857 = vmatprep.subr.bf16.mxu0 0
    %858 = vmatpush1.bf16.msra.mxu0 0
    %859 = vmatprep.subr.bf16.mxu0 0
    %860 = vmatpush1.bf16.msra.mxu0 0
    %861 = vmatprep.subr.bf16.mxu0 0
    %862 = vmatpush1.bf16.msra.mxu0 0
    %863 = vmatprep.mubr.bf16.mxu0 0
    %864 = vmatmul.mubr.bf16.gmra.mrb[0].mxu0 %v829
    %v865 = vpop.f32.mrb[0].mxu0
    %v866 = vadd.f32 0.0, %v865
    %v867 = vpop.f32.mrb[0].mxu0
    %v868 = vpop.f32.mrb[0].mxu0
    %v869 = vadd.f32 0.0, %v868
    %v870 = vpop.f32.mrb[0].mxu0
    %871 = vdwg.mxu0
    %873 = vrot.lane.b32.xlu0 %v823, 32
    %v874 = vpop.permute.xlu0 %873
    %v876 = vsel %vm114, %v874, 0
    %878 = vmatprep.subr.bf16.mxu0 0
    %879 = vmatpush1.bf16.msra.mxu0 %v409
    %880 = vmatprep.subr.bf16.mxu0 0
    %881 = vmatpush1.bf16.msra.mxu0 %v410
    %882 = vmatprep.subr.bf16.mxu0 0
    %883 = vmatpush1.bf16.msra.mxu0 0
    %884 = vmatprep.subr.bf16.mxu0 0
    %885 = vmatpush1.bf16.msra.mxu0 0
    %886 = vmatprep.subr.bf16.mxu0 0
    %887 = vmatpush1.bf16.msra.mxu0 0
    %888 = vmatprep.subr.bf16.mxu0 0
    %889 = vmatpush1.bf16.msra.mxu0 0
    %890 = vmatprep.subr.bf16.mxu0 0
    %891 = vmatpush1.bf16.msra.mxu0 0
    %892 = vmatprep.subr.bf16.mxu0 0
    %893 = vmatpush1.bf16.msra.mxu0 0
    %894 = vmatprep.subr.bf16.mxu0 0
    %895 = vmatpush1.bf16.msra.mxu0 0
    %896 = vmatprep.subr.bf16.mxu0 0
    %897 = vmatpush1.bf16.msra.mxu0 0
    %898 = vmatprep.subr.bf16.mxu0 0
    %899 = vmatpush1.bf16.msra.mxu0 0
    %900 = vmatprep.subr.bf16.mxu0 0
    %901 = vmatpush1.bf16.msra.mxu0 0
    %902 = vmatprep.subr.bf16.mxu0 0
    %903 = vmatpush1.bf16.msra.mxu0 0
    %904 = vmatprep.subr.bf16.mxu0 0
    %905 = vmatpush1.bf16.msra.mxu0 0
    %906 = vmatprep.subr.bf16.mxu0 0
    %907 = vmatpush1.bf16.msra.mxu0 0
    %908 = vmatprep.subr.bf16.mxu0 0
    %909 = vmatpush1.bf16.msra.mxu0 0
    %910 = vmatprep.mubr.bf16.mxu0 0
    %911 = vmatmul.mubr.bf16.gmra.mrb[0].mxu0 %v876
    %v912 = vpop.f32.mrb[0].mxu0
    %v913 = vadd.f32 %v866, %v912
    %v914 = vpop.f32.mrb[0].mxu0
    %v915 = vpop.f32.mrb[0].mxu0
    %v916 = vadd.f32 %v869, %v915
    %v917 = vpop.f32.mrb[0].mxu0
    %918 = vdwg.mxu0
    %v919 = vadd.f32 %v913, %v460
    %v920 = vadd.f32 %v916, %v460
    %v921 = vmul.f32 %v919, %v241
    %v922 = vmul.f32 %v920, %v241
    %v923 = vtanh.pop %v921
    %v924 = vtanh.pop %v922
    %v925 = vadd.f32 %v923, 1.0
    %v926 = vadd.f32 %v924, 1.0
    %v927 = vmul.f32 %v925, 0.5
    %v928 = vmul.f32 %v926, 0.5
    %v929 = vsel %vm240, %v923, %v927
    %v930 = vsel %vm240, %v924, %v928
    %v931 = vmul.f32 %v929, %v722
    %v932 = vmul.f32 %v930, %v723
    %935 = vrot.lane.b32.xlu0 %v929, 64
    %v936 = vpop.permute.xlu0 %935
    %937 = vrot.lane.b32.xlu0 %v930, 64
    %v938 = vpop.permute.xlu0 %937
    %v941 = vmul.f32 %v929, %v936
    %v942 = vmul.f32 %v930, %v938
    %945 = vrot.lane.b32.xlu0 %v941, 32
    %v946 = vpop.permute.xlu0 %945
    %947 = vrot.lane.b32.xlu0 %v942, 32
    %v948 = vpop.permute.xlu0 %947
    %v951 = vadd.f32 %v931, %v946
    %v952 = vadd.f32 %v932, %v948
    %v953 = vtanh.pop %v951
    %v954 = vtanh.pop %v952
    %957 = vrot.lane.b32.xlu0 %v953, 64
    %v958 = vpop.permute.xlu0 %957
    %959 = vrot.lane.b32.xlu0 %v954, 64
    %v960 = vpop.permute.xlu0 %959
    %v963 = vmul.f32 %v929, %v958
    %v964 = vmul.f32 %v930, %v960
    %965 = vmatprep.subr.bf16.mxu0 0
    %966 = vmatpush1.bf16.msra.mxu0 %v250
    %967 = vmatprep.subr.bf16.mxu0 0
    %968 = vmatpush1.bf16.msra.mxu0 %v251
    %969 = vmatprep.subr.bf16.mxu0 0
    %970 = vmatpush1.bf16.msra.mxu0 0
    %971 = vmatprep.subr.bf16.mxu0 0
    %972 = vmatpush1.bf16.msra.mxu0 0
    %973 = vmatprep.subr.bf16.mxu0 0
    %974 = vmatpush1.bf16.msra.mxu0 0
    %975 = vmatprep.subr.bf16.mxu0 0
    %976 = vmatpush1.bf16.msra.mxu0 0
    %977 = vmatprep.subr.bf16.mxu0 0
    %978 = vmatpush1.bf16.msra.mxu0 0
    %979 = vmatprep.subr.bf16.mxu0 0
    %980 = vmatpush1.bf16.msra.mxu0 0
    %981 = vmatprep.subr.bf16.mxu0 0
    %982 = vmatpush1.bf16.msra.mxu0 0
    %983 = vmatprep.subr.bf16.mxu0 0
    %984 = vmatpush1.bf16.msra.mxu0 0
    %985 = vmatprep.subr.bf16.mxu0 0
    %986 = vmatpush1.bf16.msra.mxu0 0
    %987 = vmatprep.subr.bf16.mxu0 0
    %988 = vmatpush1.bf16.msra.mxu0 0
    %989 = vmatprep.subr.bf16.mxu0 0
    %990 = vmatpush1.bf16.msra.mxu0 0
    %991 = vmatprep.subr.bf16.mxu0 0
    %992 = vmatpush1.bf16.msra.mxu0 0
    %993 = vmatprep.subr.bf16.mxu0 0
    %994 = vmatpush1.bf16.msra.mxu0 0
    %995 = vmatprep.subr.bf16.mxu0 0
    %996 = vmatpush1.bf16.msra.mxu0 0
    %997 = vmatprep.mubr.bf16.mxu0 0
    %998 = vmatmul.mubr.bf16.gmra.mrb[0].mxu0 %v876
    %v999 = vpop.f32.mrb[0].mxu0
    %v1000 = vadd.f32 0.0, %v999
    %v1001 = vpop.f32.mrb[0].mxu0
    %v1002 = vpop.f32.mrb[0].mxu0
    %v1003 = vadd.f32 0.0, %v1002
    %v1004 = vpop.f32.mrb[0].mxu0
    %1005 = vdwg.mxu0
    %v1006 = vadd.f32 %v198, %v1000
    %v1007 = vadd.f32 %v201, %v1003
    %v1008 = vmul.f32 %v1006, %v241
    %v1009 = vmul.f32 %v1007, %v241
    %v1010 = vtanh.pop %v1008
    %v1011 = vtanh.pop %v1009
    %v1012 = vadd.f32 %v1010, 1.0
    %v1013 = vadd.f32 %v1011, 1.0
    %v1014 = vmul.f32 %v1012, 0.5
    %v1015 = vmul.f32 %v1013, 0.5
    %v1016 = vsel %vm240, %v1010, %v1014
    %v1017 = vsel %vm240, %v1011, %v1015
    %v1018 = vmul.f32 %v1016, %v809
    %v1019 = vmul.f32 %v1017, %v810
    %1022 = vrot.lane.b32.xlu0 %v1016, 64
    %v1023 = vpop.permute.xlu0 %1022
    %1024 = vrot.lane.b32.xlu0 %v1017, 64
    %v1025 = vpop.permute.xlu0 %1024
    %v1028 = vmul.f32 %v1016, %v1023
    %v1029 = vmul.f32 %v1017, %v1025
    %1032 = vrot.lane.b32.xlu0 %v1028, 32
    %v1033 = vpop.permute.xlu0 %1032
    %1034 = vrot.lane.b32.xlu0 %v1029, 32
    %v1035 = vpop.permute.xlu0 %1034
    %v1038 = vadd.f32 %v1018, %v1033
    %v1039 = vadd.f32 %v1019, %v1035
    %v1040 = vtanh.pop %v1038
    %v1041 = vtanh.pop %v1039
    %1044 = vrot.lane.b32.xlu0 %v1040, 64
    %v1045 = vpop.permute.xlu0 %1044
    %1046 = vrot.lane.b32.xlu0 %v1041, 64
    %v1047 = vpop.permute.xlu0 %1046
    %v1050 = vmul.f32 %v1016, %v1045
    %v1051 = vmul.f32 %v1017, %v1047
    %v1052 = vpack.c.bf16 %v1051, %v1050
    %v1053 = vpack.c.bf16 %v964, %v963
    %1055 = vrot.lane.b32.xlu0 %v1053, 32
    %v1056 = vpop.permute.xlu0 %1055
    %v1058 = vsel %vm114, %v1056, 0
    %1060 = vmatprep.subr.bf16.mxu0 0
    %1061 = vmatpush1.bf16.msra.mxu0 %v353
    %1062 = vmatprep.subr.bf16.mxu0 0
    %1063 = vmatpush1.bf16.msra.mxu0 %v354
    %1064 = vmatprep.subr.bf16.mxu0 0
    %1065 = vmatpush1.bf16.msra.mxu0 0
    %1066 = vmatprep.subr.bf16.mxu0 0
    %1067 = vmatpush1.bf16.msra.mxu0 0
    %1068 = vmatprep.subr.bf16.mxu0 0
    %1069 = vmatpush1.bf16.msra.mxu0 0
    %1070 = vmatprep.subr.bf16.mxu0 0
    %1071 = vmatpush1.bf16.msra.mxu0 0
    %1072 = vmatprep.subr.bf16.mxu0 0
    %1073 = vmatpush1.bf16.msra.mxu0 0
    %1074 = vmatprep.subr.bf16.mxu0 0
    %1075 = vmatpush1.bf16.msra.mxu0 0
    %1076 = vmatprep.subr.bf16.mxu0 0
    %1077 = vmatpush1.bf16.msra.mxu0 0
    %1078 = vmatprep.subr.bf16.mxu0 0
    %1079 = vmatpush1.bf16.msra.mxu0 0
    %1080 = vmatprep.subr.bf16.mxu0 0
    %1081 = vmatpush1.bf16.msra.mxu0 0
    %1082 = vmatprep.subr.bf16.mxu0 0
    %1083 = vmatpush1.bf16.msra.mxu0 0
    %1084 = vmatprep.subr.bf16.mxu0 0
    %1085 = vmatpush1.bf16.msra.mxu0 0
    %1086 = vmatprep.subr.bf16.mxu0 0
    %1087 = vmatpush1.bf16.msra.mxu0 0
    %1088 = vmatprep.subr.bf16.mxu0 0
    %1089 = vmatpush1.bf16.msra.mxu0 0
    %1090 = vmatprep.subr.bf16.mxu0 0
    %1091 = vmatpush1.bf16.msra.mxu0 0
    %1092 = vmatprep.mubr.bf16.mxu0 0
    %1093 = vmatmul.mubr.bf16.gmra.mrb[0].mxu0 %v1058
    %v1094 = vpop.f32.mrb[0].mxu0
    %v1095 = vadd.f32 0.0, %v1094
    %v1096 = vpop.f32.mrb[0].mxu0
    %v1097 = vpop.f32.mrb[0].mxu0
    %v1098 = vadd.f32 0.0, %v1097
    %v1099 = vpop.f32.mrb[0].mxu0
    %1100 = vdwg.mxu0
    %1102 = vrot.lane.b32.xlu0 %v1052, 32
    %v1103 = vpop.permute.xlu0 %1102
    %v1105 = vsel %vm114, %v1103, 0
    %1107 = vmatprep.subr.bf16.mxu0 0
    %1108 = vmatpush1.bf16.msra.mxu0 %v409
    %1109 = vmatprep.subr.bf16.mxu0 0
    %1110 = vmatpush1.bf16.msra.mxu0 %v410
    %1111 = vmatprep.subr.bf16.mxu0 0
    %1112 = vmatpush1.bf16.msra.mxu0 0
    %1113 = vmatprep.subr.bf16.mxu0 0
    %1114 = vmatpush1.bf16.msra.mxu0 0
    %1115 = vmatprep.subr.bf16.mxu0 0
    %1116 = vmatpush1.bf16.msra.mxu0 0
    %1117 = vmatprep.subr.bf16.mxu0 0
    %1118 = vmatpush1.bf16.msra.mxu0 0
    %1119 = vmatprep.subr.bf16.mxu0 0
    %1120 = vmatpush1.bf16.msra.mxu0 0
    %1121 = vmatprep.subr.bf16.mxu0 0
    %1122 = vmatpush1.bf16.msra.mxu0 0
    %1123 = vmatprep.subr.bf16.mxu0 0
    %1124 = vmatpush1.bf16.msra.mxu0 0
    %1125 = vmatprep.subr.bf16.mxu0 0
    %1126 = vmatpush1.bf16.msra.mxu0 0
    %1127 = vmatprep.subr.bf16.mxu0 0
    %1128 = vmatpush1.bf16.msra.mxu0 0
    %1129 = vmatprep.subr.bf16.mxu0 0
    %1130 = vmatpush1.bf16.msra.mxu0 0
    %1131 = vmatprep.subr.bf16.mxu0 0
    %1132 = vmatpush1.bf16.msra.mxu0 0
    %1133 = vmatprep.subr.bf16.mxu0 0
    %1134 = vmatpush1.bf16.msra.mxu0 0
    %1135 = vmatprep.subr.bf16.mxu0 0
    %1136 = vmatpush1.bf16.msra.mxu0 0
    %1137 = vmatprep.subr.bf16.mxu0 0
    %1138 = vmatpush1.bf16.msra.mxu0 0
    %1139 = vmatprep.mubr.bf16.mxu0 0
    %1140 = vmatmul.mubr.bf16.gmra.mrb[0].mxu0 %v1105
    %v1141 = vpop.f32.mrb[0].mxu0
    %v1142 = vadd.f32 %v1095, %v1141
    %v1143 = vpop.f32.mrb[0].mxu0
    %v1144 = vpop.f32.mrb[0].mxu0
    %v1145 = vadd.f32 %v1098, %v1144
    %v1146 = vpop.f32.mrb[0].mxu0
    %1147 = vdwg.mxu0
    %v1148 = vadd.f32 %v1142, %v460
    %v1149 = vadd.f32 %v1145, %v460
    %v1150 = vmul.f32 %v1148, %v241
    %v1151 = vmul.f32 %v1149, %v241
    %v1152 = vtanh.pop %v1150
    %v1153 = vtanh.pop %v1151
    %v1154 = vadd.f32 %v1152, 1.0
    %v1155 = vadd.f32 %v1153, 1.0
    %v1156 = vmul.f32 %v1154, 0.5
    %v1157 = vmul.f32 %v1155, 0.5
    %v1158 = vsel %vm240, %v1152, %v1156
    %v1159 = vsel %vm240, %v1153, %v1157
    %v1160 = vmul.f32 %v1158, %v951
    %v1161 = vmul.f32 %v1159, %v952
    %1164 = vrot.lane.b32.xlu0 %v1158, 64
    %v1165 = vpop.permute.xlu0 %1164
    %1166 = vrot.lane.b32.xlu0 %v1159, 64
    %v1167 = vpop.permute.xlu0 %1166
    %v1170 = vmul.f32 %v1158, %v1165
    %v1171 = vmul.f32 %v1159, %v1167
    %1174 = vrot.lane.b32.xlu0 %v1170, 32
    %v1175 = vpop.permute.xlu0 %1174
    %1176 = vrot.lane.b32.xlu0 %v1171, 32
    %v1177 = vpop.permute.xlu0 %1176
    %v1180 = vadd.f32 %v1160, %v1175
    %v1181 = vadd.f32 %v1161, %v1177
    %v1182 = vtanh.pop %v1180
    %v1183 = vtanh.pop %v1181
    %1186 = vrot.lane.b32.xlu0 %v1182, 64
    %v1187 = vpop.permute.xlu0 %1186
    %1188 = vrot.lane.b32.xlu0 %v1183, 64
    %v1189 = vpop.permute.xlu0 %1188
    %v1192 = vmul.f32 %v1158, %v1187
    %v1193 = vmul.f32 %v1159, %v1189
    %1194 = vmatprep.subr.bf16.mxu0 0
    %1195 = vmatpush1.bf16.msra.mxu0 %v250
    %1196 = vmatprep.subr.bf16.mxu0 0
    %1197 = vmatpush1.bf16.msra.mxu0 %v251
    %1198 = vmatprep.subr.bf16.mxu0 0
    %1199 = vmatpush1.bf16.msra.mxu0 0
    %1200 = vmatprep.subr.bf16.mxu0 0
    %1201 = vmatpush1.bf16.msra.mxu0 0
    %1202 = vmatprep.subr.bf16.mxu0 0
    %1203 = vmatpush1.bf16.msra.mxu0 0
    %1204 = vmatprep.subr.bf16.mxu0 0
    %1205 = vmatpush1.bf16.msra.mxu0 0
    %1206 = vmatprep.subr.bf16.mxu0 0
    %1207 = vmatpush1.bf16.msra.mxu0 0
    %1208 = vmatprep.subr.bf16.mxu0 0
    %1209 = vmatpush1.bf16.msra.mxu0 0
    %1210 = vmatprep.subr.bf16.mxu0 0
    %1211 = vmatpush1.bf16.msra.mxu0 0
    %1212 = vmatprep.subr.bf16.mxu0 0
    %1213 = vmatpush1.bf16.msra.mxu0 0
    %1214 = vmatprep.subr.bf16.mxu0 0
    %1215 = vmatpush1.bf16.msra.mxu0 0
    %1216 = vmatprep.subr.bf16.mxu0 0
    %1217 = vmatpush1.bf16.msra.mxu0 0
    %1218 = vmatprep.subr.bf16.mxu0 0
    %1219 = vmatpush1.bf16.msra.mxu0 0
    %1220 = vmatprep.subr.bf16.mxu0 0
    %1221 = vmatpush1.bf16.msra.mxu0 0
    %1222 = vmatprep.subr.bf16.mxu0 0
    %1223 = vmatpush1.bf16.msra.mxu0 0
    %1224 = vmatprep.subr.bf16.mxu0 0
    %1225 = vmatpush1.bf16.msra.mxu0 0
    %1226 = vmatprep.mubr.bf16.mxu0 0
    %1227 = vmatmul.mubr.bf16.gmra.mrb[0].mxu0 %v1105
    %v1228 = vpop.f32.mrb[0].mxu0
    %v1229 = vadd.f32 0.0, %v1228
    %v1230 = vpop.f32.mrb[0].mxu0
    %v1231 = vpop.f32.mrb[0].mxu0
    %v1232 = vadd.f32 0.0, %v1231
    %v1233 = vpop.f32.mrb[0].mxu0
    %1234 = vdwg.mxu0
    %v1235 = vadd.f32 %v206, %v1229
    %v1236 = vadd.f32 %v209, %v1232
    %v1237 = vmul.f32 %v1235, %v241
    %v1238 = vmul.f32 %v1236, %v241
    %v1239 = vtanh.pop %v1237
    %v1240 = vtanh.pop %v1238
    %v1241 = vadd.f32 %v1239, 1.0
    %v1242 = vadd.f32 %v1240, 1.0
    %v1243 = vmul.f32 %v1241, 0.5
    %v1244 = vmul.f32 %v1242, 0.5
    %v1245 = vsel %vm240, %v1239, %v1243
    %v1246 = vsel %vm240, %v1240, %v1244
    %v1247 = vmul.f32 %v1245, %v1038
    %v1248 = vmul.f32 %v1246, %v1039
    %1251 = vrot.lane.b32.xlu0 %v1245, 64
    %v1252 = vpop.permute.xlu0 %1251
    %1253 = vrot.lane.b32.xlu0 %v1246, 64
    %v1254 = vpop.permute.xlu0 %1253
    %v1257 = vmul.f32 %v1245, %v1252
    %v1258 = vmul.f32 %v1246, %v1254
    %1261 = vrot.lane.b32.xlu0 %v1257, 32
    %v1262 = vpop.permute.xlu0 %1261
    %1263 = vrot.lane.b32.xlu0 %v1258, 32
    %v1264 = vpop.permute.xlu0 %1263
    %v1267 = vadd.f32 %v1247, %v1262
    %v1268 = vadd.f32 %v1248, %v1264
    %v1269 = vtanh.pop %v1267
    %v1270 = vtanh.pop %v1268
    %1273 = vrot.lane.b32.xlu0 %v1269, 64
    %v1274 = vpop.permute.xlu0 %1273
    %1275 = vrot.lane.b32.xlu0 %v1270, 64
    %v1276 = vpop.permute.xlu0 %1275
    %v1279 = vmul.f32 %v1245, %v1274
    %v1280 = vmul.f32 %v1246, %v1276
    %v1281 = vpack.c.bf16 %v1280, %v1279
    %v1282 = vpack.c.bf16 %v1193, %v1192
    %1284 = vrot.lane.b32.xlu0 %v1282, 32
    %v1285 = vpop.permute.xlu0 %1284
    %v1287 = vsel %vm114, %v1285, 0
    %1289 = vmatprep.subr.bf16.mxu0 0
    %1290 = vmatpush1.bf16.msra.mxu0 %v353
    %1291 = vmatprep.subr.bf16.mxu0 0
    %1292 = vmatpush1.bf16.msra.mxu0 %v354
    %1293 = vmatprep.subr.bf16.mxu0 0
    %1294 = vmatpush1.bf16.msra.mxu0 0
    %1295 = vmatprep.subr.bf16.mxu0 0
    %1296 = vmatpush1.bf16.msra.mxu0 0
    %1297 = vmatprep.subr.bf16.mxu0 0
    %1298 = vmatpush1.bf16.msra.mxu0 0
    %1299 = vmatprep.subr.bf16.mxu0 0
    %1300 = vmatpush1.bf16.msra.mxu0 0
    %1301 = vmatprep.subr.bf16.mxu0 0
    %1302 = vmatpush1.bf16.msra.mxu0 0
    %1303 = vmatprep.subr.bf16.mxu0 0
    %1304 = vmatpush1.bf16.msra.mxu0 0
    %1305 = vmatprep.subr.bf16.mxu0 0
    %1306 = vmatpush1.bf16.msra.mxu0 0
    %1307 = vmatprep.subr.bf16.mxu0 0
    %1308 = vmatpush1.bf16.msra.mxu0 0
    %1309 = vmatprep.subr.bf16.mxu0 0
    %1310 = vmatpush1.bf16.msra.mxu0 0
    %1311 = vmatprep.subr.bf16.mxu0 0
    %1312 = vmatpush1.bf16.msra.mxu0 0
    %1313 = vmatprep.subr.bf16.mxu0 0
    %1314 = vmatpush1.bf16.msra.mxu0 0
    %1315 = vmatprep.subr.bf16.mxu0 0
    %1316 = vmatpush1.bf16.msra.mxu0 0
    %1317 = vmatprep.subr.bf16.mxu0 0
    %1318 = vmatpush1.bf16.msra.mxu0 0
    %1319 = vmatprep.subr.bf16.mxu0 0
    %1320 = vmatpush1.bf16.msra.mxu0 0
    %1321 = vmatprep.mubr.bf16.mxu0 0
    %1322 = vmatmul.mubr.bf16.gmra.mrb[0].mxu0 %v1287
    %v1323 = vpop.f32.mrb[0].mxu0
    %v1324 = vadd.f32 0.0, %v1323
    %v1325 = vpop.f32.mrb[0].mxu0
    %v1326 = vpop.f32.mrb[0].mxu0
    %v1327 = vadd.f32 0.0, %v1326
    %v1328 = vpop.f32.mrb[0].mxu0
    %1329 = vdwg.mxu0
    %1331 = vrot.lane.b32.xlu0 %v1281, 32
    %v1332 = vpop.permute.xlu0 %1331
    %v1334 = vsel %vm114, %v1332, 0
    %1336 = vmatprep.subr.bf16.mxu0 0
    %1337 = vmatpush1.bf16.msra.mxu0 %v409
    %1338 = vmatprep.subr.bf16.mxu0 0
    %1339 = vmatpush1.bf16.msra.mxu0 %v410
    %1340 = vmatprep.subr.bf16.mxu0 0
    %1341 = vmatpush1.bf16.msra.mxu0 0
    %1342 = vmatprep.subr.bf16.mxu0 0
    %1343 = vmatpush1.bf16.msra.mxu0 0
    %1344 = vmatprep.subr.bf16.mxu0 0
    %1345 = vmatpush1.bf16.msra.mxu0 0
    %1346 = vmatprep.subr.bf16.mxu0 0
    %1347 = vmatpush1.bf16.msra.mxu0 0
    %1348 = vmatprep.subr.bf16.mxu0 0
    %1349 = vmatpush1.bf16.msra.mxu0 0
    %1350 = vmatprep.subr.bf16.mxu0 0
    %1351 = vmatpush1.bf16.msra.mxu0 0
    %1352 = vmatprep.subr.bf16.mxu0 0
    %1353 = vmatpush1.bf16.msra.mxu0 0
    %1354 = vmatprep.subr.bf16.mxu0 0
    %1355 = vmatpush1.bf16.msra.mxu0 0
    %1356 = vmatprep.subr.bf16.mxu0 0
    %1357 = vmatpush1.bf16.msra.mxu0 0
    %1358 = vmatprep.subr.bf16.mxu0 0
    %1359 = vmatpush1.bf16.msra.mxu0 0
    %1360 = vmatprep.subr.bf16.mxu0 0
    %1361 = vmatpush1.bf16.msra.mxu0 0
    %1362 = vmatprep.subr.bf16.mxu0 0
    %1363 = vmatpush1.bf16.msra.mxu0 0
    %1364 = vmatprep.subr.bf16.mxu0 0
    %1365 = vmatpush1.bf16.msra.mxu0 0
    %1366 = vmatprep.subr.bf16.mxu0 0
    %1367 = vmatpush1.bf16.msra.mxu0 0
    %1368 = vmatprep.mubr.bf16.mxu0 0
    %1369 = vmatmul.mubr.bf16.gmra.mrb[0].mxu0 %v1334
    %v1370 = vpop.f32.mrb[0].mxu0
    %v1371 = vadd.f32 %v1324, %v1370
    %v1372 = vpop.f32.mrb[0].mxu0
    %v1373 = vpop.f32.mrb[0].mxu0
    %v1374 = vadd.f32 %v1327, %v1373
    %v1375 = vpop.f32.mrb[0].mxu0
    %1376 = vdwg.mxu0
    %v1377 = vadd.f32 %v1371, %v460
    %v1378 = vadd.f32 %v1374, %v460
    %v1379 = vmul.f32 %v1377, %v241
    %v1380 = vmul.f32 %v1378, %v241
    %v1381 = vtanh.pop %v1379
    %v1382 = vtanh.pop %v1380
    %v1383 = vadd.f32 %v1381, 1.0
    %v1384 = vadd.f32 %v1382, 1.0
    %v1385 = vmul.f32 %v1383, 0.5
    %v1386 = vmul.f32 %v1384, 0.5
    %v1387 = vsel %vm240, %v1381, %v1385
    %v1388 = vsel %vm240, %v1382, %v1386
    %v1389 = vmul.f32 %v1387, %v1180
    %v1390 = vmul.f32 %v1388, %v1181
    %1393 = vrot.lane.b32.xlu0 %v1387, 64
    %v1394 = vpop.permute.xlu0 %1393
    %1395 = vrot.lane.b32.xlu0 %v1388, 64
    %v1396 = vpop.permute.xlu0 %1395
    %v1399 = vmul.f32 %v1387, %v1394
    %v1400 = vmul.f32 %v1388, %v1396
    %1403 = vrot.lane.b32.xlu0 %v1399, 32
    %v1404 = vpop.permute.xlu0 %1403
    %1405 = vrot.lane.b32.xlu0 %v1400, 32
    %v1406 = vpop.permute.xlu0 %1405
    %v1409 = vadd.f32 %v1389, %v1404
    %v1410 = vadd.f32 %v1390, %v1406
    %v1411 = vtanh.pop %v1409
    %v1412 = vtanh.pop %v1410
    %1415 = vrot.lane.b32.xlu0 %v1411, 64
    %v1416 = vpop.permute.xlu0 %1415
    %1417 = vrot.lane.b32.xlu0 %v1412, 64
    %v1418 = vpop.permute.xlu0 %1417
    %v1421 = vmul.f32 %v1387, %v1416
    %v1422 = vmul.f32 %v1388, %v1418
    %1423 = vmatprep.subr.bf16.mxu0 0
    %1424 = vmatpush1.bf16.msra.mxu0 %v250
    %1425 = vmatprep.subr.bf16.mxu0 0
    %1426 = vmatpush1.bf16.msra.mxu0 %v251
    %1427 = vmatprep.subr.bf16.mxu0 0
    %1428 = vmatpush1.bf16.msra.mxu0 0
    %1429 = vmatprep.subr.bf16.mxu0 0
    %1430 = vmatpush1.bf16.msra.mxu0 0
    %1431 = vmatprep.subr.bf16.mxu0 0
    %1432 = vmatpush1.bf16.msra.mxu0 0
    %1433 = vmatprep.subr.bf16.mxu0 0
    %1434 = vmatpush1.bf16.msra.mxu0 0
    %1435 = vmatprep.subr.bf16.mxu0 0
    %1436 = vmatpush1.bf16.msra.mxu0 0
    %1437 = vmatprep.subr.bf16.mxu0 0
    %1438 = vmatpush1.bf16.msra.mxu0 0
    %1439 = vmatprep.subr.bf16.mxu0 0
    %1440 = vmatpush1.bf16.msra.mxu0 0
    %1441 = vmatprep.subr.bf16.mxu0 0
    %1442 = vmatpush1.bf16.msra.mxu0 0
    %1443 = vmatprep.subr.bf16.mxu0 0
    %1444 = vmatpush1.bf16.msra.mxu0 0
    %1445 = vmatprep.subr.bf16.mxu0 0
    %1446 = vmatpush1.bf16.msra.mxu0 0
    %1447 = vmatprep.subr.bf16.mxu0 0
    %1448 = vmatpush1.bf16.msra.mxu0 0
    %1449 = vmatprep.subr.bf16.mxu0 0
    %1450 = vmatpush1.bf16.msra.mxu0 0
    %1451 = vmatprep.subr.bf16.mxu0 0
    %1452 = vmatpush1.bf16.msra.mxu0 0
    %1453 = vmatprep.subr.bf16.mxu0 0
    %1454 = vmatpush1.bf16.msra.mxu0 0
    %1455 = vmatprep.mubr.bf16.mxu0 0
    %1456 = vmatmul.mubr.bf16.gmra.mrb[0].mxu0 %v1334
    %v1457 = vpop.f32.mrb[0].mxu0
    %v1458 = vadd.f32 0.0, %v1457
    %v1459 = vpop.f32.mrb[0].mxu0
    %v1460 = vpop.f32.mrb[0].mxu0
    %v1461 = vadd.f32 0.0, %v1460
    %v1462 = vpop.f32.mrb[0].mxu0
    %1463 = vdwg.mxu0
    %v1464 = vadd.f32 %v214, %v1458
    %v1465 = vadd.f32 %v217, %v1461
    %v1466 = vmul.f32 %v1464, %v241
    %v1467 = vmul.f32 %v1465, %v241
    %v1468 = vtanh.pop %v1466
    %v1469 = vtanh.pop %v1467
    %v1470 = vadd.f32 %v1468, 1.0
    %v1471 = vadd.f32 %v1469, 1.0
    %v1472 = vmul.f32 %v1470, 0.5
    %v1473 = vmul.f32 %v1471, 0.5
    %v1474 = vsel %vm240, %v1468, %v1472
    %v1475 = vsel %vm240, %v1469, %v1473
    %v1476 = vmul.f32 %v1474, %v1267
    %v1477 = vmul.f32 %v1475, %v1268
    %1480 = vrot.lane.b32.xlu0 %v1474, 64
    %v1481 = vpop.permute.xlu0 %1480
    %1482 = vrot.lane.b32.xlu0 %v1475, 64
    %v1483 = vpop.permute.xlu0 %1482
    %v1486 = vmul.f32 %v1474, %v1481
    %v1487 = vmul.f32 %v1475, %v1483
    %1490 = vrot.lane.b32.xlu0 %v1486, 32
    %v1491 = vpop.permute.xlu0 %1490
    %1492 = vrot.lane.b32.xlu0 %v1487, 32
    %v1493 = vpop.permute.xlu0 %1492
    %v1496 = vadd.f32 %v1476, %v1491
    %v1497 = vadd.f32 %v1477, %v1493
    %v1498 = vtanh.pop %v1496
    %v1499 = vtanh.pop %v1497
    %1502 = vrot.lane.b32.xlu0 %v1498, 64
    %v1503 = vpop.permute.xlu0 %1502
    %1504 = vrot.lane.b32.xlu0 %v1499, 64
    %v1505 = vpop.permute.xlu0 %1504
    %v1508 = vmul.f32 %v1474, %v1503
    %v1509 = vmul.f32 %v1475, %v1505
    %v1510 = vpack.c.bf16 %v1509, %v1508
    %v1511 = vpack.c.bf16 %v1422, %v1421
    %1513 = vrot.lane.b32.xlu0 %v1511, 32
    %v1514 = vpop.permute.xlu0 %1513
    %v1516 = vsel %vm114, %v1514, 0
    %1518 = vmatprep.subr.bf16.mxu0 0
    %1519 = vmatpush1.bf16.msra.mxu0 %v353
    %1520 = vmatprep.subr.bf16.mxu0 0
    %1521 = vmatpush1.bf16.msra.mxu0 %v354
    %1522 = vmatprep.subr.bf16.mxu0 0
    %1523 = vmatpush1.bf16.msra.mxu0 0
    %1524 = vmatprep.subr.bf16.mxu0 0
    %1525 = vmatpush1.bf16.msra.mxu0 0
    %1526 = vmatprep.subr.bf16.mxu0 0
    %1527 = vmatpush1.bf16.msra.mxu0 0
    %1528 = vmatprep.subr.bf16.mxu0 0
    %1529 = vmatpush1.bf16.msra.mxu0 0
    %1530 = vmatprep.subr.bf16.mxu0 0
    %1531 = vmatpush1.bf16.msra.mxu0 0
    %1532 = vmatprep.subr.bf16.mxu0 0
    %1533 = vmatpush1.bf16.msra.mxu0 0
    %1534 = vmatprep.subr.bf16.mxu0 0
    %1535 = vmatpush1.bf16.msra.mxu0 0
    %1536 = vmatprep.subr.bf16.mxu0 0
    %1537 = vmatpush1.bf16.msra.mxu0 0
    %1538 = vmatprep.subr.bf16.mxu0 0
    %1539 = vmatpush1.bf16.msra.mxu0 0
    %1540 = vmatprep.subr.bf16.mxu0 0
    %1541 = vmatpush1.bf16.msra.mxu0 0
    %1542 = vmatprep.subr.bf16.mxu0 0
    %1543 = vmatpush1.bf16.msra.mxu0 0
    %1544 = vmatprep.subr.bf16.mxu0 0
    %1545 = vmatpush1.bf16.msra.mxu0 0
    %1546 = vmatprep.subr.bf16.mxu0 0
    %1547 = vmatpush1.bf16.msra.mxu0 0
    %1548 = vmatprep.subr.bf16.mxu0 0
    %1549 = vmatpush1.bf16.msra.mxu0 0
    %1550 = vmatprep.mubr.bf16.mxu0 0
    %1551 = vmatmul.mubr.bf16.gmra.mrb[0].mxu0 %v1516
    %v1552 = vpop.f32.mrb[0].mxu0
    %v1553 = vadd.f32 0.0, %v1552
    %v1554 = vpop.f32.mrb[0].mxu0
    %v1555 = vpop.f32.mrb[0].mxu0
    %v1556 = vadd.f32 0.0, %v1555
    %v1557 = vpop.f32.mrb[0].mxu0
    %1558 = vdwg.mxu0
    %1560 = vrot.lane.b32.xlu0 %v1510, 32
    %v1561 = vpop.permute.xlu0 %1560
    %v1563 = vsel %vm114, %v1561, 0
    %1565 = vmatprep.subr.bf16.mxu0 0
    %1566 = vmatpush1.bf16.msra.mxu0 %v409
    %1567 = vmatprep.subr.bf16.mxu0 0
    %1568 = vmatpush1.bf16.msra.mxu0 %v410
    %1569 = vmatprep.subr.bf16.mxu0 0
    %1570 = vmatpush1.bf16.msra.mxu0 0
    %1571 = vmatprep.subr.bf16.mxu0 0
    %1572 = vmatpush1.bf16.msra.mxu0 0
    %1573 = vmatprep.subr.bf16.mxu0 0
    %1574 = vmatpush1.bf16.msra.mxu0 0
    %1575 = vmatprep.subr.bf16.mxu0 0
    %1576 = vmatpush1.bf16.msra.mxu0 0
    %1577 = vmatprep.subr.bf16.mxu0 0
    %1578 = vmatpush1.bf16.msra.mxu0 0
    %1579 = vmatprep.subr.bf16.mxu0 0
    %1580 = vmatpush1.bf16.msra.mxu0 0
    %1581 = vmatprep.subr.bf16.mxu0 0
    %1582 = vmatpush1.bf16.msra.mxu0 0
    %1583 = vmatprep.subr.bf16.mxu0 0
    %1584 = vmatpush1.bf16.msra.mxu0 0
    %1585 = vmatprep.subr.bf16.mxu0 0
    %1586 = vmatpush1.bf16.msra.mxu0 0
    %1587 = vmatprep.subr.bf16.mxu0 0
    %1588 = vmatpush1.bf16.msra.mxu0 0
    %1589 = vmatprep.subr.bf16.mxu0 0
    %1590 = vmatpush1.bf16.msra.mxu0 0
    %1591 = vmatprep.subr.bf16.mxu0 0
    %1592 = vmatpush1.bf16.msra.mxu0 0
    %1593 = vmatprep.subr.bf16.mxu0 0
    %1594 = vmatpush1.bf16.msra.mxu0 0
    %1595 = vmatprep.subr.bf16.mxu0 0
    %1596 = vmatpush1.bf16.msra.mxu0 0
    %1597 = vmatprep.mubr.bf16.mxu0 0
    %1598 = vmatmul.mubr.bf16.gmra.mrb[0].mxu0 %v1563
    %v1599 = vpop.f32.mrb[0].mxu0
    %v1600 = vadd.f32 %v1553, %v1599
    %v1601 = vpop.f32.mrb[0].mxu0
    %v1602 = vpop.f32.mrb[0].mxu0
    %v1603 = vadd.f32 %v1556, %v1602
    %v1604 = vpop.f32.mrb[0].mxu0
    %1605 = vdwg.mxu0
    %v1606 = vadd.f32 %v1600, %v460
    %v1607 = vadd.f32 %v1603, %v460
    %v1608 = vmul.f32 %v1606, %v241
    %v1609 = vmul.f32 %v1607, %v241
    %v1610 = vtanh.pop %v1608
    %v1611 = vtanh.pop %v1609
    %v1612 = vadd.f32 %v1610, 1.0
    %v1613 = vadd.f32 %v1611, 1.0
    %v1614 = vmul.f32 %v1612, 0.5
    %v1615 = vmul.f32 %v1613, 0.5
    %v1616 = vsel %vm240, %v1610, %v1614
    %v1617 = vsel %vm240, %v1611, %v1615
    %v1618 = vmul.f32 %v1616, %v1409
    %v1619 = vmul.f32 %v1617, %v1410
    %1622 = vrot.lane.b32.xlu0 %v1616, 64
    %v1623 = vpop.permute.xlu0 %1622
    %1624 = vrot.lane.b32.xlu0 %v1617, 64
    %v1625 = vpop.permute.xlu0 %1624
    %v1628 = vmul.f32 %v1616, %v1623
    %v1629 = vmul.f32 %v1617, %v1625
    %1632 = vrot.lane.b32.xlu0 %v1628, 32
    %v1633 = vpop.permute.xlu0 %1632
    %1634 = vrot.lane.b32.xlu0 %v1629, 32
    %v1635 = vpop.permute.xlu0 %1634
    %v1638 = vadd.f32 %v1618, %v1633
    %v1639 = vadd.f32 %v1619, %v1635
    %v1640 = vtanh.pop %v1638
    %v1641 = vtanh.pop %v1639
    %1644 = vrot.lane.b32.xlu0 %v1640, 64
    %v1645 = vpop.permute.xlu0 %1644
    %1646 = vrot.lane.b32.xlu0 %v1641, 64
    %v1647 = vpop.permute.xlu0 %1646
    %v1650 = vmul.f32 %v1616, %v1645
    %v1651 = vmul.f32 %v1617, %v1647
    %1652 = vmatprep.subr.bf16.mxu0 0
    %1653 = vmatpush1.bf16.msra.mxu0 %v250
    %1654 = vmatprep.subr.bf16.mxu0 0
    %1655 = vmatpush1.bf16.msra.mxu0 %v251
    %1656 = vmatprep.subr.bf16.mxu0 0
    %1657 = vmatpush1.bf16.msra.mxu0 0
    %1658 = vmatprep.subr.bf16.mxu0 0
    %1659 = vmatpush1.bf16.msra.mxu0 0
    %1660 = vmatprep.subr.bf16.mxu0 0
    %1661 = vmatpush1.bf16.msra.mxu0 0
    %1662 = vmatprep.subr.bf16.mxu0 0
    %1663 = vmatpush1.bf16.msra.mxu0 0
    %1664 = vmatprep.subr.bf16.mxu0 0
    %1665 = vmatpush1.bf16.msra.mxu0 0
    %1666 = vmatprep.subr.bf16.mxu0 0
    %1667 = vmatpush1.bf16.msra.mxu0 0
    %1668 = vmatprep.subr.bf16.mxu0 0
    %1669 = vmatpush1.bf16.msra.mxu0 0
    %1670 = vmatprep.subr.bf16.mxu0 0
    %1671 = vmatpush1.bf16.msra.mxu0 0
    %1672 = vmatprep.subr.bf16.mxu0 0
    %1673 = vmatpush1.bf16.msra.mxu0 0
    %1674 = vmatprep.subr.bf16.mxu0 0
    %1675 = vmatpush1.bf16.msra.mxu0 0
    %1676 = vmatprep.subr.bf16.mxu0 0
    %1677 = vmatpush1.bf16.msra.mxu0 0
    %1678 = vmatprep.subr.bf16.mxu0 0
    %1679 = vmatpush1.bf16.msra.mxu0 0
    %1680 = vmatprep.subr.bf16.mxu0 0
    %1681 = vmatpush1.bf16.msra.mxu0 0
    %1682 = vmatprep.subr.bf16.mxu0 0
    %1683 = vmatpush1.bf16.msra.mxu0 0
    %1684 = vmatprep.mubr.bf16.mxu0 0
    %1685 = vmatmul.mubr.bf16.gmra.mrb[0].mxu0 %v1563
    %v1686 = vpop.f32.mrb[0].mxu0
    %v1687 = vadd.f32 0.0, %v1686
    %v1688 = vpop.f32.mrb[0].mxu0
    %v1689 = vpop.f32.mrb[0].mxu0
    %v1690 = vadd.f32 0.0, %v1689
    %v1691 = vpop.f32.mrb[0].mxu0
    %1692 = vdwg.mxu0
    %v1693 = vadd.f32 %v222, %v1687
    %v1694 = vadd.f32 %v225, %v1690
    %v1695 = vmul.f32 %v1693, %v241
    %v1696 = vmul.f32 %v1694, %v241
    %v1697 = vtanh.pop %v1695
    %v1698 = vtanh.pop %v1696
    %v1699 = vadd.f32 %v1697, 1.0
    %v1700 = vadd.f32 %v1698, 1.0
    %v1701 = vmul.f32 %v1699, 0.5
    %v1702 = vmul.f32 %v1700, 0.5
    %v1703 = vsel %vm240, %v1697, %v1701
    %v1704 = vsel %vm240, %v1698, %v1702
    %v1705 = vmul.f32 %v1703, %v1496
    %v1706 = vmul.f32 %v1704, %v1497
    %1709 = vrot.lane.b32.xlu0 %v1703, 64
    %v1710 = vpop.permute.xlu0 %1709
    %1711 = vrot.lane.b32.xlu0 %v1704, 64
    %v1712 = vpop.permute.xlu0 %1711
    %v1715 = vmul.f32 %v1703, %v1710
    %v1716 = vmul.f32 %v1704, %v1712
    %1719 = vrot.lane.b32.xlu0 %v1715, 32
    %v1720 = vpop.permute.xlu0 %1719
    %1721 = vrot.lane.b32.xlu0 %v1716, 32
    %v1722 = vpop.permute.xlu0 %1721
    %v1725 = vadd.f32 %v1705, %v1720
    %v1726 = vadd.f32 %v1706, %v1722
    %v1727 = vtanh.pop %v1725
    %v1728 = vtanh.pop %v1726
    %1731 = vrot.lane.b32.xlu0 %v1727, 64
    %v1732 = vpop.permute.xlu0 %1731
    %1733 = vrot.lane.b32.xlu0 %v1728, 64
    %v1734 = vpop.permute.xlu0 %1733
    %v1737 = vmul.f32 %v1703, %v1732
    %v1738 = vmul.f32 %v1704, %v1734
    %v1739 = vpack.c.bf16 %v1738, %v1737
    %v1740 = vpack.c.bf16 %v1651, %v1650
    %1742 = vrot.lane.b32.xlu0 %v1740, 32
    %v1743 = vpop.permute.xlu0 %1742
    %v1745 = vsel %vm114, %v1743, 0
    %1747 = vmatprep.subr.bf16.mxu0 0
    %1748 = vmatpush1.bf16.msra.mxu0 %v353
    %1749 = vmatprep.subr.bf16.mxu0 0
    %1750 = vmatpush1.bf16.msra.mxu0 %v354
    %1751 = vmatprep.subr.bf16.mxu0 0
    %1752 = vmatpush1.bf16.msra.mxu0 0
    %1753 = vmatprep.subr.bf16.mxu0 0
    %1754 = vmatpush1.bf16.msra.mxu0 0
    %1755 = vmatprep.subr.bf16.mxu0 0
    %1756 = vmatpush1.bf16.msra.mxu0 0
    %1757 = vmatprep.subr.bf16.mxu0 0
    %1758 = vmatpush1.bf16.msra.mxu0 0
    %1759 = vmatprep.subr.bf16.mxu0 0
    %1760 = vmatpush1.bf16.msra.mxu0 0
    %1761 = vmatprep.subr.bf16.mxu0 0
    %1762 = vmatpush1.bf16.msra.mxu0 0
    %1763 = vmatprep.subr.bf16.mxu0 0
    %1764 = vmatpush1.bf16.msra.mxu0 0
    %1765 = vmatprep.subr.bf16.mxu0 0
    %1766 = vmatpush1.bf16.msra.mxu0 0
    %1767 = vmatprep.subr.bf16.mxu0 0
    %1768 = vmatpush1.bf16.msra.mxu0 0
    %1769 = vmatprep.subr.bf16.mxu0 0
    %1770 = vmatpush1.bf16.msra.mxu0 0
    %1771 = vmatprep.subr.bf16.mxu0 0
    %1772 = vmatpush1.bf16.msra.mxu0 0
    %1773 = vmatprep.subr.bf16.mxu0 0
    %1774 = vmatpush1.bf16.msra.mxu0 0
    %1775 = vmatprep.subr.bf16.mxu0 0
    %1776 = vmatpush1.bf16.msra.mxu0 0
    %1777 = vmatprep.subr.bf16.mxu0 0
    %1778 = vmatpush1.bf16.msra.mxu0 0
    %1779 = vmatprep.mubr.bf16.mxu0 0
    %1780 = vmatmul.mubr.bf16.gmra.mrb[0].mxu0 %v1745
    %v1781 = vpop.f32.mrb[0].mxu0
    %v1782 = vadd.f32 0.0, %v1781
    %v1783 = vpop.f32.mrb[0].mxu0
    %v1784 = vpop.f32.mrb[0].mxu0
    %v1785 = vadd.f32 0.0, %v1784
    %v1786 = vpop.f32.mrb[0].mxu0
    %1787 = vdwg.mxu0
    %1789 = vrot.lane.b32.xlu0 %v1739, 32
    %v1790 = vpop.permute.xlu0 %1789
    %v1792 = vsel %vm114, %v1790, 0
    %1794 = vmatprep.subr.bf16.mxu0 0
    %1795 = vmatpush1.bf16.msra.mxu0 %v409
    %1796 = vmatprep.subr.bf16.mxu0 0
    %1797 = vmatpush1.bf16.msra.mxu0 %v410
    %1798 = vmatprep.subr.bf16.mxu0 0
    %1799 = vmatpush1.bf16.msra.mxu0 0
    %1800 = vmatprep.subr.bf16.mxu0 0
    %1801 = vmatpush1.bf16.msra.mxu0 0
    %1802 = vmatprep.subr.bf16.mxu0 0
    %1803 = vmatpush1.bf16.msra.mxu0 0
    %1804 = vmatprep.subr.bf16.mxu0 0
    %1805 = vmatpush1.bf16.msra.mxu0 0
    %1806 = vmatprep.subr.bf16.mxu0 0
    %1807 = vmatpush1.bf16.msra.mxu0 0
    %1808 = vmatprep.subr.bf16.mxu0 0
    %1809 = vmatpush1.bf16.msra.mxu0 0
    %1810 = vmatprep.subr.bf16.mxu0 0
    %1811 = vmatpush1.bf16.msra.mxu0 0
    %1812 = vmatprep.subr.bf16.mxu0 0
    %1813 = vmatpush1.bf16.msra.mxu0 0
    %1814 = vmatprep.subr.bf16.mxu0 0
    %1815 = vmatpush1.bf16.msra.mxu0 0
    %1816 = vmatprep.subr.bf16.mxu0 0
    %1817 = vmatpush1.bf16.msra.mxu0 0
    %1818 = vmatprep.subr.bf16.mxu0 0
    %1819 = vmatpush1.bf16.msra.mxu0 0
    %1820 = vmatprep.subr.bf16.mxu0 0
    %1821 = vmatpush1.bf16.msra.mxu0 0
    %1822 = vmatprep.subr.bf16.mxu0 0
    %1823 = vmatpush1.bf16.msra.mxu0 0
    %1824 = vmatprep.subr.bf16.mxu0 0
    %1825 = vmatpush1.bf16.msra.mxu0 0
    %1826 = vmatprep.mubr.bf16.mxu0 0
    %1827 = vmatmul.mubr.bf16.gmra.mrb[0].mxu0 %v1792
    %v1828 = vpop.f32.mrb[0].mxu0
    %v1829 = vadd.f32 %v1782, %v1828
    %v1830 = vpop.f32.mrb[0].mxu0
    %v1831 = vpop.f32.mrb[0].mxu0
    %v1832 = vadd.f32 %v1785, %v1831
    %v1833 = vpop.f32.mrb[0].mxu0
    %1834 = vdwg.mxu0
    %v1835 = vadd.f32 %v1829, %v460
    %v1836 = vadd.f32 %v1832, %v460
    %v1837 = vmul.f32 %v1835, %v241
    %v1838 = vmul.f32 %v1836, %v241
    %v1839 = vtanh.pop %v1837
    %v1840 = vtanh.pop %v1838
    %v1841 = vadd.f32 %v1839, 1.0
    %v1842 = vadd.f32 %v1840, 1.0
    %v1843 = vmul.f32 %v1841, 0.5
    %v1844 = vmul.f32 %v1842, 0.5
    %v1845 = vsel %vm240, %v1839, %v1843
    %v1846 = vsel %vm240, %v1840, %v1844
    %v1847 = vmul.f32 %v1845, %v1638
    %v1848 = vmul.f32 %v1846, %v1639
    %1851 = vrot.lane.b32.xlu0 %v1845, 64
    %v1852 = vpop.permute.xlu0 %1851
    %1853 = vrot.lane.b32.xlu0 %v1846, 64
    %v1854 = vpop.permute.xlu0 %1853
    %v1857 = vmul.f32 %v1845, %v1852
    %v1858 = vmul.f32 %v1846, %v1854
    %1861 = vrot.lane.b32.xlu0 %v1857, 32
    %v1862 = vpop.permute.xlu0 %1861
    %1863 = vrot.lane.b32.xlu0 %v1858, 32
    %v1864 = vpop.permute.xlu0 %1863
    %v1867 = vadd.f32 %v1847, %v1862
    %v1868 = vadd.f32 %v1848, %v1864
    %v1869 = vtanh.pop %v1867
    %v1870 = vtanh.pop %v1868
    %1873 = vrot.lane.b32.xlu0 %v1869, 64
    %v1874 = vpop.permute.xlu0 %1873
    %1875 = vrot.lane.b32.xlu0 %v1870, 64
    %v1876 = vpop.permute.xlu0 %1875
    %v1879 = vmul.f32 %v1845, %v1874
    %v1880 = vmul.f32 %v1846, %v1876
    %1881 = vmatprep.subr.bf16.mxu0 0
    %1882 = vmatpush1.bf16.msra.mxu0 %v250
    %1883 = vmatprep.subr.bf16.mxu0 0
    %1884 = vmatpush1.bf16.msra.mxu0 %v251
    %1885 = vmatprep.subr.bf16.mxu0 0
    %1886 = vmatpush1.bf16.msra.mxu0 0
    %1887 = vmatprep.subr.bf16.mxu0 0
    %1888 = vmatpush1.bf16.msra.mxu0 0
    %1889 = vmatprep.subr.bf16.mxu0 0
    %1890 = vmatpush1.bf16.msra.mxu0 0
    %1891 = vmatprep.subr.bf16.mxu0 0
    %1892 = vmatpush1.bf16.msra.mxu0 0
    %1893 = vmatprep.subr.bf16.mxu0 0
    %1894 = vmatpush1.bf16.msra.mxu0 0
    %1895 = vmatprep.subr.bf16.mxu0 0
    %1896 = vmatpush1.bf16.msra.mxu0 0
    %1897 = vmatprep.subr.bf16.mxu0 0
    %1898 = vmatpush1.bf16.msra.mxu0 0
    %1899 = vmatprep.subr.bf16.mxu0 0
    %1900 = vmatpush1.bf16.msra.mxu0 0
    %1901 = vmatprep.subr.bf16.mxu0 0
    %1902 = vmatpush1.bf16.msra.mxu0 0
    %1903 = vmatprep.subr.bf16.mxu0 0
    %1904 = vmatpush1.bf16.msra.mxu0 0
    %1905 = vmatprep.subr.bf16.mxu0 0
    %1906 = vmatpush1.bf16.msra.mxu0 0
    %1907 = vmatprep.subr.bf16.mxu0 0
    %1908 = vmatpush1.bf16.msra.mxu0 0
    %1909 = vmatprep.subr.bf16.mxu0 0
    %1910 = vmatpush1.bf16.msra.mxu0 0
    %1911 = vmatprep.subr.bf16.mxu0 0
    %1912 = vmatpush1.bf16.msra.mxu0 0
    %1913 = vmatprep.mubr.bf16.mxu0 0
    %1914 = vmatmul.mubr.bf16.gmra.mrb[0].mxu0 %v1792
    %v1915 = vpop.f32.mrb[0].mxu0
    %v1916 = vadd.f32 0.0, %v1915
    %v1917 = vpop.f32.mrb[0].mxu0
    %v1918 = vpop.f32.mrb[0].mxu0
    %v1919 = vadd.f32 0.0, %v1918
    %v1920 = vpop.f32.mrb[0].mxu0
    %1921 = vdwg.mxu0
    %v1922 = vadd.f32 %v230, %v1916
    %v1923 = vadd.f32 %v233, %v1919
    %v1924 = vmul.f32 %v1922, %v241
    %v1925 = vmul.f32 %v1923, %v241
    %v1926 = vtanh.pop %v1924
    %v1927 = vtanh.pop %v1925
    %v1928 = vadd.f32 %v1926, 1.0
    %v1929 = vadd.f32 %v1927, 1.0
    %v1930 = vmul.f32 %v1928, 0.5
    %v1931 = vmul.f32 %v1929, 0.5
    %v1932 = vsel %vm240, %v1926, %v1930
    %v1933 = vsel %vm240, %v1927, %v1931
    %v1934 = vmul.f32 %v1932, %v1725
    %v1935 = vmul.f32 %v1933, %v1726
    %1938 = vrot.lane.b32.xlu0 %v1932, 64
    %v1939 = vpop.permute.xlu0 %1938
    %1940 = vrot.lane.b32.xlu0 %v1933, 64
    %v1941 = vpop.permute.xlu0 %1940
    %v1944 = vmul.f32 %v1932, %v1939
    %v1945 = vmul.f32 %v1933, %v1941
    %1948 = vrot.lane.b32.xlu0 %v1944, 32
    %v1949 = vpop.permute.xlu0 %1948
    %1950 = vrot.lane.b32.xlu0 %v1945, 32
    %v1951 = vpop.permute.xlu0 %1950
    %v1954 = vadd.f32 %v1934, %v1949
    %v1955 = vadd.f32 %v1935, %v1951
    %v1956 = vtanh.pop %v1954
    %v1957 = vtanh.pop %v1955
    %1960 = vrot.lane.b32.xlu0 %v1956, 64
    %v1961 = vpop.permute.xlu0 %1960
    %1962 = vrot.lane.b32.xlu0 %v1957, 64
    %v1963 = vpop.permute.xlu0 %1962
    %v1966 = vmul.f32 %v1932, %v1961
    %v1967 = vmul.f32 %v1933, %v1963
    %v1968 = vpack.c.bf16 %v1967, %v1966
    %v1969 = vpack.c.bf16 %v1880, %v1879
    %1971 = vrot.lane.b32.xlu0 %v1969, 32
    %v1972 = vpop.permute.xlu0 %1971
    %v1974 = vsel %vm114, %v1972, 0
    %1976 = vmatprep.subr.bf16.mxu0 0
    %1977 = vmatpush1.bf16.msra.mxu0 %v353
    %1978 = vmatprep.subr.bf16.mxu0 0
    %1979 = vmatpush1.bf16.msra.mxu0 %v354
    %1980 = vmatprep.subr.bf16.mxu0 0
    %1981 = vmatpush1.bf16.msra.mxu0 0
    %1982 = vmatprep.subr.bf16.mxu0 0
    %1983 = vmatpush1.bf16.msra.mxu0 0
    %1984 = vmatprep.subr.bf16.mxu0 0
    %1985 = vmatpush1.bf16.msra.mxu0 0
    %1986 = vmatprep.subr.bf16.mxu0 0
    %1987 = vmatpush1.bf16.msra.mxu0 0
    %1988 = vmatprep.subr.bf16.mxu0 0
    %1989 = vmatpush1.bf16.msra.mxu0 0
    %1990 = vmatprep.subr.bf16.mxu0 0
    %1991 = vmatpush1.bf16.msra.mxu0 0
    %1992 = vmatprep.subr.bf16.mxu0 0
    %1993 = vmatpush1.bf16.msra.mxu0 0
    %1994 = vmatprep.subr.bf16.mxu0 0
    %1995 = vmatpush1.bf16.msra.mxu0 0
    %1996 = vmatprep.subr.bf16.mxu0 0
    %1997 = vmatpush1.bf16.msra.mxu0 0
    %1998 = vmatprep.subr.bf16.mxu0 0
    %1999 = vmatpush1.bf16.msra.mxu0 0
    %2000 = vmatprep.subr.bf16.mxu0 0
    %2001 = vmatpush1.bf16.msra.mxu0 0
    %2002 = vmatprep.subr.bf16.mxu0 0
    %2003 = vmatpush1.bf16.msra.mxu0 0
    %2004 = vmatprep.subr.bf16.mxu0 0
    %2005 = vmatpush1.bf16.msra.mxu0 0
    %2006 = vmatprep.subr.bf16.mxu0 0
    %2007 = vmatpush1.bf16.msra.mxu0 0
    %2008 = vmatprep.mubr.bf16.mxu0 0
    %2009 = vmatmul.mubr.bf16.gmra.mrb[0].mxu0 %v1974
    %v2010 = vpop.f32.mrb[0].mxu0
    %v2011 = vadd.f32 0.0, %v2010
    %v2012 = vpop.f32.mrb[0].mxu0
    %v2013 = vpop.f32.mrb[0].mxu0
    %v2014 = vadd.f32 0.0, %v2013
    %v2015 = vpop.f32.mrb[0].mxu0
    %2016 = vdwg.mxu0
    %2018 = vrot.lane.b32.xlu0 %v1968, 32
    %v2019 = vpop.permute.xlu0 %2018
    %v2021 = vsel %vm114, %v2019, 0
    %2023 = vmatprep.subr.bf16.mxu0 0
    %2024 = vmatpush1.bf16.msra.mxu0 %v409
    %2025 = vmatprep.subr.bf16.mxu0 0
    %2026 = vmatpush1.bf16.msra.mxu0 %v410
    %2027 = vmatprep.subr.bf16.mxu0 0
    %2028 = vmatpush1.bf16.msra.mxu0 0
    %2029 = vmatprep.subr.bf16.mxu0 0
    %2030 = vmatpush1.bf16.msra.mxu0 0
    %2031 = vmatprep.subr.bf16.mxu0 0
    %2032 = vmatpush1.bf16.msra.mxu0 0
    %2033 = vmatprep.subr.bf16.mxu0 0
    %2034 = vmatpush1.bf16.msra.mxu0 0
    %2035 = vmatprep.subr.bf16.mxu0 0
    %2036 = vmatpush1.bf16.msra.mxu0 0
    %2037 = vmatprep.subr.bf16.mxu0 0
    %2038 = vmatpush1.bf16.msra.mxu0 0
    %2039 = vmatprep.subr.bf16.mxu0 0
    %2040 = vmatpush1.bf16.msra.mxu0 0
    %2041 = vmatprep.subr.bf16.mxu0 0
    %2042 = vmatpush1.bf16.msra.mxu0 0
    %2043 = vmatprep.subr.bf16.mxu0 0
    %2044 = vmatpush1.bf16.msra.mxu0 0
    %2045 = vmatprep.subr.bf16.mxu0 0
    %2046 = vmatpush1.bf16.msra.mxu0 0
    %2047 = vmatprep.subr.bf16.mxu0 0
    %2048 = vmatpush1.bf16.msra.mxu0 0
    %2049 = vmatprep.subr.bf16.mxu0 0
    %2050 = vmatpush1.bf16.msra.mxu0 0
    %2051 = vmatprep.subr.bf16.mxu0 0
    %2052 = vmatpush1.bf16.msra.mxu0 0
    %2053 = vmatprep.subr.bf16.mxu0 0
    %2054 = vmatpush1.bf16.msra.mxu0 0
    %2055 = vmatprep.mubr.bf16.mxu0 0
    %2056 = vmatmul.mubr.bf16.gmra.mrb[0].mxu0 %v2021
    %v2057 = vpop.f32.mrb[0].mxu0
    %v2058 = vadd.f32 %v2011, %v2057
    %v2059 = vpop.f32.mrb[0].mxu0
    %v2060 = vpop.f32.mrb[0].mxu0
    %v2061 = vadd.f32 %v2014, %v2060
    %v2062 = vpop.f32.mrb[0].mxu0
    %2063 = vdwg.mxu0
    %v2064 = vadd.f32 %v2058, %v460
    %v2065 = vadd.f32 %v2061, %v460
    %v2066 = vmul.f32 %v2064, %v241
    %v2067 = vmul.f32 %v2065, %v241
    %v2068 = vtanh.pop %v2066
    %v2069 = vtanh.pop %v2067
    %v2070 = vadd.f32 %v2068, 1.0
    %v2071 = vadd.f32 %v2069, 1.0
    %v2072 = vmul.f32 %v2070, 0.5
    %v2073 = vmul.f32 %v2071, 0.5
    %v2074 = vsel %vm240, %v2068, %v2072
    %v2075 = vsel %vm240, %v2069, %v2073
    %v2076 = vmul.f32 %v2074, %v1867
    %v2077 = vmul.f32 %v2075, %v1868
    %2080 = vrot.lane.b32.xlu0 %v2074, 64
    %v2081 = vpop.permute.xlu0 %2080
    %2082 = vrot.lane.b32.xlu0 %v2075, 64
    %v2083 = vpop.permute.xlu0 %2082
    %v2086 = vmul.f32 %v2074, %v2081
    %v2087 = vmul.f32 %v2075, %v2083
    %2090 = vrot.lane.b32.xlu0 %v2086, 32
    %v2091 = vpop.permute.xlu0 %2090
    %2092 = vrot.lane.b32.xlu0 %v2087, 32
    %v2093 = vpop.permute.xlu0 %2092
    %v2096 = vadd.f32 %v2076, %v2091
    %v2097 = vadd.f32 %v2077, %v2093
    %v2098 = vtanh.pop %v2096
    %v2099 = vtanh.pop %v2097
    %2102 = vrot.lane.b32.xlu0 %v2098, 64
    %v2103 = vpop.permute.xlu0 %2102
    %2104 = vrot.lane.b32.xlu0 %v2099, 64
    %v2105 = vpop.permute.xlu0 %2104
    %v2108 = vmul.f32 %v2074, %v2103
    %v2109 = vmul.f32 %v2075, %v2105
    %2112 = vrot.lane.b32.xlu0 %v1966, 32
    %v2113 = vpop.permute.xlu0 %2112
    %2114 = vrot.lane.b32.xlu0 %v1967, 32
    %v2115 = vpop.permute.xlu0 %2114
    %v2118 = vsel %vm114, %v2113, %v1954
    %v2119 = vsel %vm114, %v2115, %v1955
    %2122 = vrot.lane.b32.xlu0 %v2108, 32
    %v2123 = vpop.permute.xlu0 %2122
    %2124 = vrot.lane.b32.xlu0 %v2109, 32
    %v2125 = vpop.permute.xlu0 %2124
    %v2128 = vsel %vm114, %v2123, %v2096
    %v2129 = vsel %vm114, %v2125, %v2097
    %2132 = vrot.lane.b32.xlu0 %v2128, 64
    %v2133 = vpop.permute.xlu0 %2132
    %2134 = vrot.lane.b32.xlu0 %v2129, 64
    %v2135 = vpop.permute.xlu0 %2134
    %vm2138 = vcmask 523264
    %v2139 = vsel %vm2138, %v2118, %v2133
    %v2140 = vsel %vm2138, %v2119, %v2135
    %v2141 = vtanh.pop %v2139
    %v2142 = vtanh.pop %v2140
    %v2143 = vpack.c.bf16 %v2142, %v2141
    %v2144 = vld [vmem:[%s3] sm:$0xf]
    %v2145 = vld [vmem:[%s3 + $0x4] sm:$0xf]
    %v2146 = vld [vmem:[%s3 + $0x8] sm:$0xf]
    %v2147 = vld [vmem:[%s3 + $0xc] sm:$0xf]
    %v2148 = vld [vmem:[%s3 + $0x10] sm:$0xf]
    %v2149 = vld [vmem:[%s3 + $0x14] sm:$0xf]
    %v2150 = vld [vmem:[%s3 + $0x18] sm:$0xf]
    %v2151 = vld [vmem:[%s3 + $0x1c] sm:$0xf]
    %v2152 = vld [vmem:[%s3 + $0x20] sm:$0xf]
    %v2153 = vld [vmem:[%s3 + $0x24] sm:$0xf]
    %v2154 = vld [vmem:[%s3 + $0x28] sm:$0xf]
    %v2155 = vld [vmem:[%s3 + $0x2c] sm:$0xf]
    %v2156 = vld [vmem:[%s3 + $0x30] sm:$0xf]
    %v2157 = vld [vmem:[%s3 + $0x34] sm:$0xf]
    %v2158 = vld [vmem:[%s3 + $0x38] sm:$0xf]
    %v2159 = vld [vmem:[%s3 + $0x3c] sm:$0xf]
    %v2160 = vld [vmem:[%s5] sm:$0x1]
    %v2162 = vlaneseq
    %v2163 = vshrl.u32 %v2162, 7
    %v2164 = vsub.s32 0, %v2163
    %v2165 = vrot.slane %v2160, %v2164
    %v2183 = vunpack.c.l.b16 %v2144
    %v2184 = vunpack.c.l.b16 %v2145
    %v2185 = vunpack.c.l.b16 %v2146
    %v2186 = vunpack.c.l.b16 %v2147
    %v2187 = vunpack.c.l.b16 %v2148
    %v2188 = vunpack.c.l.b16 %v2149
    %v2189 = vunpack.c.l.b16 %v2150
    %v2190 = vunpack.c.l.b16 %v2151
    %v2191 = vunpack.c.l.b16 %v2152
    %v2192 = vunpack.c.l.b16 %v2153
    %v2193 = vunpack.c.l.b16 %v2154
    %v2194 = vunpack.c.l.b16 %v2155
    %v2195 = vunpack.c.l.b16 %v2156
    %v2196 = vunpack.c.l.b16 %v2157
    %v2197 = vunpack.c.l.b16 %v2158
    %v2198 = vunpack.c.l.b16 %v2159
    %v2199 = vpack.c.b16 %v2184, %v2183
    %v2200 = vpack.c.b16 %v2186, %v2185
    %v2201 = vpack.c.b16 %v2188, %v2187
    %v2202 = vpack.c.b16 %v2190, %v2189
    %v2203 = vpack.c.b16 %v2192, %v2191
    %v2204 = vpack.c.b16 %v2194, %v2193
    %v2205 = vpack.c.b16 %v2196, %v2195
    %v2206 = vpack.c.b16 %v2198, %v2197
    %2215 = vmatprep.subr.bf16.mxu0 0
    %2216 = vmatpush1.bf16.msra.mxu0 %v2199
    %2217 = vmatprep.subr.bf16.mxu0 0
    %2218 = vmatpush1.bf16.msra.mxu0 %v2200
    %2219 = vmatprep.subr.bf16.mxu0 0
    %2220 = vmatpush1.bf16.msra.mxu0 %v2201
    %2221 = vmatprep.subr.bf16.mxu0 0
    %2222 = vmatpush1.bf16.msra.mxu0 %v2202
    %2223 = vmatprep.subr.bf16.mxu0 0
    %2224 = vmatpush1.bf16.msra.mxu0 %v2203
    %2225 = vmatprep.subr.bf16.mxu0 0
    %2226 = vmatpush1.bf16.msra.mxu0 %v2204
    %2227 = vmatprep.subr.bf16.mxu0 0
    %2228 = vmatpush1.bf16.msra.mxu0 %v2205
    %2229 = vmatprep.subr.bf16.mxu0 0
    %2230 = vmatpush1.bf16.msra.mxu0 %v2206
    %2231 = vmatprep.subr.bf16.mxu0 0
    %2232 = vmatpush1.bf16.msra.mxu0 0
    %2233 = vmatprep.subr.bf16.mxu0 0
    %2234 = vmatpush1.bf16.msra.mxu0 0
    %2235 = vmatprep.subr.bf16.mxu0 0
    %2236 = vmatpush1.bf16.msra.mxu0 0
    %2237 = vmatprep.subr.bf16.mxu0 0
    %2238 = vmatpush1.bf16.msra.mxu0 0
    %2239 = vmatprep.subr.bf16.mxu0 0
    %2240 = vmatpush1.bf16.msra.mxu0 0
    %2241 = vmatprep.subr.bf16.mxu0 0
    %2242 = vmatpush1.bf16.msra.mxu0 0
    %2243 = vmatprep.subr.bf16.mxu0 0
    %2244 = vmatpush1.bf16.msra.mxu0 0
    %2245 = vmatprep.subr.bf16.mxu0 0
    %2246 = vmatpush1.bf16.msra.mxu0 0
    %2247 = vmatprep.mubr.bf16.mxu0 0
    %2248 = vmatmul.mubr.bf16.gmra.mrb[0].mxu0 %v2143
    %v2249 = vpop.f32.mrb[0].mxu0
    %v2250 = vadd.f32 %v2165, %v2249
    %v2251 = vpop.f32.mrb[0].mxu0
    %v2252 = vpop.f32.mrb[0].mxu0
    %v2253 = vadd.f32 %v2165, %v2252
    %v2254 = vpop.f32.mrb[0].mxu0
    %2255 = vdwg.mxu0
    %2256 = vst.msk [vmem:[#allocation2] sm:$0xff] %vm114, %v2250
    %2257 = vst.msk [vmem:[#allocation2 + $0x8] sm:$0xff] %vm114, %v2253
    // Predicated region
    $region26: #{tpu_custom_call.1} parent=1 // pred_check
      _
    $region27: #{tpu_custom_call.1} parent=1 // pred_check_branch
      %2259 = sbr.rel (0) target = $region29
    $region28: #{tpu_custom_call.1} parent=1 // pred_region
      %s2261 = ssub.s32 256, 256
      %2262 = vsyncadd [#allocation3], %s2261
      %s2263 = sshll.u32 [#allocation2], 4
      %s2264 = int_to_ptr.vmem [resolvable:$true] %s2263
      %2269 = dma.vmem_to_hbm [thread:$0]  %s2264, 256, %s6, [#allocation3], 128, 128, 8
    $region29: #{tpu_custom_call.1} parent=1 // pred_fallthru
      _
    // Predicated region
    $region30: #{tpu_custom_call.1} parent=1 // pred_check
      _
    $region31: #{tpu_custom_call.1} parent=1 // pred_check_branch
      %2271 = sbr.rel (0) target = $region33
    $region32: #{tpu_custom_call.1} parent=1 // pred_region
      %2272 = dma.done [#allocation3], 256
    $region33: #{tpu_custom_call.1} parent=1 // pred_fallthru
      _
    %2273 = vsyncpa [#allocation3], 1

</llo_original>
